<compile_context>
chip_gen: v7x
topology: tpu7x:2x2x1
jax: 0.10.0
libtpu: 0.0.40
codegen_flags: <defaults>
</compile_context>

<pallas_src>
import jax
import jax.numpy as jnp
from jax import lax
from jax.experimental import pallas as pl
from jax.experimental.pallas import tpu as pltpu


# ---------------------------------------------------------------------------
# Kernel
# ---------------------------------------------------------------------------
def _conv3x3_relu_ps_kernel(xc_ref, xt_ref, xb_ref, w_ref, b_ref, o_ref):
    # xc_ref: (1, TH, W, Cin)  -- rows [i*TH, i*TH+TH) of the (H-padded) input
    # xt_ref: (1, 1,  W, Cin)  -- row i*TH-1 (index clamped; zero-masked @ i==0)
    # xb_ref: (1, 1,  W, Cin)  -- row i*TH+TH (index clamped; zero-masked @ last)
    # w_ref : (3, 3*Cin, Cout) bf16 -- per-ky folded (kx, cin) weight slabs
    # b_ref : (1, Cout)        f32  -- bias (channels permuted to (dh,dw,c))
    # o_ref : (1, TH, 2, W, 2*Cin)  -- fused pixel-shuffle layout
    _, TH, _, W, C2 = o_ref.shape           # C2 == 2*C
    Cin = xc_ref.shape[-1]
    Cout = w_ref.shape[-1]                  # Cout == 4*C

    i = pl.program_id(1)
    top_scale = (i > 0).astype(jnp.bfloat16)                       # 0 at top edge
    bot_scale = (i < pl.num_programs(1) - 1).astype(jnp.bfloat16)  # 0 at bottom

    # (TH+2, W, Cin) row stack: [top-halo, body, bottom-halo], bf16 for the MXU.
    rows = jnp.concatenate(
        [xt_ref[0].astype(jnp.bfloat16) * top_scale,
         xc_ref[0].astype(jnp.bfloat16),
         xb_ref[0].astype(jnp.bfloat16) * bot_scale],
        axis=0)

    # One shifted-column slab, built once:
    #   slab[r, x, kx*Cin + c] = input[row r-1, x + kx - 1, c]
    # The "same" padding columns are the zero column concatenated here, so no
    # wrapper-side spatial pad pass exists at all.
    zcol = jnp.zeros((TH + 2, 1, Cin), jnp.bfloat16)
    left = jnp.concatenate([zcol, rows[:, :W - 1, :]], axis=1)   # col x-1
    right = jnp.concatenate([rows[:, 1:, :], zcol], axis=1)      # col x+1
    slab = jnp.concatenate([left, rows, right], axis=-1)         # (TH+2, W, 3*Cin)

    # 3 dots with K = 3*Cin (kx folded into the contraction); f32 accumulate.
    acc = jnp.zeros((TH, W, Cout), jnp.float32)
    for ky in range(3):
        acc += lax.dot_general(
            slab[ky:ky + TH], w_ref[ky],
            dimension_numbers=(((2,), (0,)), ((), ())),
            preferred_element_type=jnp.float32)

    y = jnp.maximum(acc + b_ref[...], 0.0)   # bias + ReLU in f32

    # Fused PixelShuffle(2): conv channels are ordered o' = dh*2C + dw*C + c, so
    # the two dh halves drop straight into the (..., 2, W, 2C) output block.
    o_ref[0, :, 0, :, :] = y[:, :, :C2].astype(o_ref.dtype)
    o_ref[0, :, 1, :, :] = y[:, :, C2:].astype(o_ref.dtype)


# ---------------------------------------------------------------------------
# Tiling / VMEM heuristics (generation aware)
# ---------------------------------------------------------------------------
def _vmem_limit_bytes() -> int:
    """64-MiB-VMEM chips (v7x) -> 48 MiB; 128-MiB chips (v5e/v6e) -> 64 MiB."""
    try:
        phys = int(pltpu.get_tpu_info().vmem_capacity_bytes)
    except Exception:
        phys = 128 * 1024 * 1024
    if phys <= 64 * 1024 * 1024:
        return 48 * 1024 * 1024
    return 64 * 1024 * 1024


def _tile_vmem_bytes(th, W, C, in_bytes, out_bytes):
    """Conservative per-grid-step VMEM estimate for a TH-row tile."""
    Cout = 4 * C
    in_blk = th * W * C * in_bytes                 # body block
    halo = 2 * W * C * in_bytes                    # two 1-row halo blocks
    out_blk = th * 2 * W * 2 * C * out_bytes       # (1, th, 2, W, 2C) block
    const = 3 * 3 * C * Cout * 2 + Cout * 4        # bf16 weights + f32 bias
    # In-kernel live values: bf16 row stack + left/right shifts + 3C slab
    # (+ per-ky slab slice copies) and the f32 accumulator / activation.
    live = (th + 2) * W * C * 2 * 6 + th * W * (3 * C * 2 + 2 * Cout * 4)
    # Pipelined blocks (and, conservatively, the constant ones) double-buffer.
    return 2 * (in_blk + halo + out_blk + const) + live


def _pick_tile_h(H, W, C, in_bytes, out_bytes, budget):
    """Pick a row-tile height: biggest that fits, preferring divisors of H."""
    th_max = 1
    for th in range(1, H + 1):
        if _tile_vmem_bytes(th, W, C, in_bytes, out_bytes) <= budget:
            th_max = th
    # Prefer an exact divisor of H (no H padding / output slice) unless the
    # best divisor is much smaller than what VMEM allows (prime/odd-H cliff).
    th_div = max((d for d in range(1, th_max + 1) if H % d == 0), default=1)
    if th_div == H or th_div >= max(8, th_max // 2):
        return th_div
    # Otherwise minimize padding at the minimal number of row tiles.
    n_h = -(-H // th_max)
    return -(-H // n_h)
    # TODO(synk): add a W tile (1-column halo) for very wide images on v7x
    # where even TH=1 would not fit the 64 MiB VMEM.


# ---------------------------------------------------------------------------
# Wrappers
# ---------------------------------------------------------------------------
def upsample_block_nhwc(x_nhwc, weight_oihw, bias, *, tile_h=None,
                        out_dtype=jnp.bfloat16):
    """NHWC-native _UpsampleBlock forward: (B,H,W,C) -> (B,2H,2W,C).

    out_dtype defaults to bf16 (halves the dominant HBM writeback); pass
    out_dtype=x_nhwc.dtype for output-dtype parity with the PyTorch module.
    """
    B, H, W, C = x_nhwc.shape
    Cout = weight_oihw.shape[0]
    assert Cout == 4 * C and weight_oihw.shape[1:] == (C, 3, 3)

    # Permute conv output channels to (dh, dw, c) order so PixelShuffle(2) is a
    # free, contiguous reshape of the kernel output: new channel
    # o' = dh*2C + dw*C + c picks original PyTorch channel c*4 + dh*2 + dw.
    dh = jnp.arange(2)[:, None, None]
    dw = jnp.arange(2)[None, :, None]
    cc = jnp.arange(C)[None, None, :]
    perm = (cc * 4 + dh * 2 + dw).reshape(-1)                    # (4C,)
    w_p = weight_oihw[perm]                                      # (4C, C, 3, 3)
    b_p = bias[perm]

    # OIHW -> (ky, kx, cin, cout), fold (kx, cin) into K: (3, 3*C, 4C); bf16 MXU.
    w_k = jnp.transpose(w_p, (2, 3, 1, 0)).reshape(3, 3 * C, Cout).astype(jnp.bfloat16)
    b2d = b_p.reshape(1, Cout).astype(jnp.float32)

    in_bytes = jnp.dtype(x_nhwc.dtype).itemsize
    out_bytes = jnp.dtype(out_dtype).itemsize
    vmem_limit = _vmem_limit_bytes()
    if tile_h is None:
        tile_h = _pick_tile_h(H, W, C, in_bytes, out_bytes,
                              vmem_limit - 4 * 1024 * 1024)
    th = int(tile_h)

    # Robustness for H with no good divisors / user-chosen tile_h: pad H up to
    # a multiple of th with zero rows (their outputs are sliced off below).
    n_h = -(-H // th)
    H_pad = n_h * th
    x_in = x_nhwc if H_pad == H else jnp.pad(
        x_nhwc, ((0, 0), (0, H_pad - H), (0, 0), (0, 0)))

    out5 = pl.pallas_call(
        _conv3x3_relu_ps_kernel,
        out_shape=jax.ShapeDtypeStruct((B, H_pad, 2, W, 2 * C), out_dtype),
        grid_spec=pltpu.PrefetchScalarGridSpec(
            num_scalar_prefetch=0,
            grid=(B, n_h),
            in_specs=[
                # current TH rows of the raw (unpadded) input
                pl.BlockSpec((1, th, W, C), lambda b, i: (b, i, 0, 0)),
                # 1-row top/bottom halos; index clamped at the image border and
                # zero-masked in-kernel (replaces the wrapper-side pad pass)
                pl.BlockSpec((1, 1, W, C),
                             lambda b, i: (b, jnp.maximum(i * th - 1, 0), 0, 0)),
                pl.BlockSpec((1, 1, W, C),
                             lambda b, i: (b, jnp.minimum(i * th + th, H_pad - 1), 0, 0)),
                # folded weights + bias (constant blocks)
                # TODO(synk): mark these pipeline_mode=pl.Buffered(1) once
                # single-buffered constant blocks are verified on all targets.
                pl.BlockSpec((3, 3 * C, Cout), lambda b, i: (0, 0, 0)),
                pl.BlockSpec((1, Cout), lambda b, i: (0, 0)),
            ],
            out_specs=pl.BlockSpec((1, th, 2, W, 2 * C),
                                   lambda b, i: (b, i, 0, 0, 0)),
        ),
        compiler_params=pltpu.CompilerParams(
            dimension_semantics=("parallel", "parallel"),
            vmem_limit_bytes=vmem_limit),
    )(x_in, x_in, x_in, w_k, b2d)

    if H_pad != H:
        out5 = out5[:, :H]
    # Contiguous (metadata-only) reshape: (B, H, 2, W, 2C) -> (B, 2H, 2W, C).
    return out5.reshape(B, 2 * H, 2 * W, C)


def upsample_block(x_nchw, weight_oihw, bias, *, tile_h=None,
                   out_dtype=jnp.bfloat16):
    """PyTorch-facing NCHW API: (B,C,H,W) -> (B,C,2H,2W).

    If the surrounding model is NHWC, call upsample_block_nhwc directly and
    skip both layout transposes.
    """
    x_nhwc = jnp.transpose(x_nchw, (0, 2, 3, 1))
    out_nhwc = upsample_block_nhwc(x_nhwc, weight_oihw, bias,
                                   tile_h=tile_h, out_dtype=out_dtype)
    return jnp.transpose(out_nhwc, (0, 3, 1, 2))


# ---------------------------------------------------------------------------
# Reference (pure JAX, f32) and self-test
# ---------------------------------------------------------------------------
def _reference(x_nchw, weight_oihw, bias):
    conv = lax.conv_general_dilated(
        x_nchw, weight_oihw, window_strides=(1, 1), padding=((1, 1), (1, 1)),
        dimension_numbers=("NCHW", "OIHW", "NCHW"))
    conv = jnp.maximum(conv + bias[None, :, None, None], 0.0)
    B, O, H, W = conv.shape
    C = O // 4
    ps = conv.reshape(B, C, 2, 2, H, W)
    ps = jnp.transpose(ps, (0, 1, 4, 2, 5, 3))
    return ps.reshape(B, C, 2 * H, 2 * W)


if __name__ == "__main__":
    B, C, H, W = 2, 4, 16, 16
    key = jax.random.PRNGKey(0)
    kx_, kw_, kb_ = jax.random.split(key, 3)

    x = jax.random.normal(kx_, (B, C, H, W), dtype=jnp.float32)
    fan_in = C * 3 * 3
    weight = jax.random.normal(kw_, (4 * C, C, 3, 3), dtype=jnp.float32) * (1.0 / fan_in) ** 0.5
    bias = jax.random.uniform(kb_, (4 * C,), dtype=jnp.float32,
                              minval=-(1.0 / fan_in) ** 0.5, maxval=(1.0 / fan_in) ** 0.5)

    ref = jax.block_until_ready(_reference(x, weight, bias))

    out_auto = jax.block_until_ready(upsample_block(x, weight, bias))            # auto tile (th=H)
    out_tiled = jax.block_until_ready(upsample_block(x, weight, bias, tile_h=8))  # multi-tile halos
    out_ragged = jax.block_until_ready(upsample_block(x, weight, bias, tile_h=6)) # H % tile_h != 0

    for out in (out_auto, out_tiled, out_ragged):
        assert out.shape == (B, C, 2 * H, 2 * W), out.shape
        # bf16 MXU inputs + bf16 output -> looser tolerance vs the f32 reference.
        # (This is an intentional precision change per the perf review; pass
        # out_dtype=x.dtype to keep f32 output writeback.)
        out_f32 = out.astype(jnp.float32)
        assert jnp.allclose(out_f32, ref, atol=7.5e-2, rtol=7.5e-2), \
            float(jnp.max(jnp.abs(out_f32 - ref)))
    print("KERNEL_OK")
</pallas_src>

<mosaic_0001>
module attributes {stable_mosaic.version = 11 : i64} {
  func.func @_conv3x3_relu_ps_kernel(%arg0: i32, %arg1: i32, %arg2: memref<1x16x16x4xf32, #tpu.memory_space<vmem>>, %arg3: memref<1x1x16x4xf32, #tpu.memory_space<vmem>>, %arg4: memref<1x1x16x4xf32, #tpu.memory_space<vmem>>, %arg5: memref<3x12x16xbf16, #tpu.memory_space<vmem>>, %arg6: memref<1x16xf32, #tpu.memory_space<vmem>>, %arg7: memref<1x16x2x16x8xbf16, #tpu.memory_space<vmem>>) attributes {dimension_semantics = [#tpu.dimension_semantics<parallel>, #tpu.dimension_semantics<parallel>], iteration_bounds = array<i64: 2, 1>, scalar_prefetch = 0 : i64, scratch_operands = 0 : i64, tpu.core_type = #tpu.core_type<tc>, window_params = [{transform_indices = @transform_0, window_bounds = array<i64: 1, 16, 16, 4>}, {transform_indices = @transform_1, window_bounds = array<i64: 1, 1, 16, 4>}, {transform_indices = @transform_2, window_bounds = array<i64: 1, 1, 16, 4>}, {pipeline_mode = #tpu.pipeline_mode<synchronous>, transform_indices = @transform_3, window_bounds = array<i64: 3, 12, 16>}, {pipeline_mode = #tpu.pipeline_mode<synchronous>, transform_indices = @transform_4, window_bounds = array<i64: 1, 16>}, {transform_indices = @transform_5, window_bounds = array<i64: 1, 16, 2, 16, 8>}]} {
    %c0_i32 = arith.constant 0 : i32
    %0 = arith.cmpi sgt, %arg1, %c0_i32 : i32
    %1 = arith.extui %0 : i1 to i32
    %2 = arith.sitofp %1 : i32 to f32
    %3 = arith.truncf %2 : f32 to bf16
    %c0_i32_0 = arith.constant 0 : i32
    %4 = arith.cmpi slt, %arg1, %c0_i32_0 : i32
    %5 = arith.extui %4 : i1 to i32
    %6 = arith.sitofp %5 : i32 to f32
    %7 = arith.truncf %6 : f32 to bf16
    %c0 = arith.constant 0 : index
    %c0_1 = arith.constant 0 : index
    %c0_2 = arith.constant 0 : index
    %c0_3 = arith.constant 0 : index
    %8 = vector.load %arg3[%c0, %c0_1, %c0_2, %c0_3] : memref<1x1x16x4xf32, #tpu.memory_space<vmem>>, vector<1x1x16x4xf32>
    %9 = vector.shape_cast %8 : vector<1x1x16x4xf32> to vector<1x16x4xf32>
    %10 = arith.truncf %9 : vector<1x16x4xf32> to vector<1x16x4xbf16>
    %11 = vector.broadcast %3 : bf16 to vector<1x16x4xbf16>
    %12 = arith.mulf %10, %11 : vector<1x16x4xbf16>
    %c0_4 = arith.constant 0 : index
    %c0_5 = arith.constant 0 : index
    %c0_6 = arith.constant 0 : index
    %c0_7 = arith.constant 0 : index
    %13 = vector.load %arg2[%c0_4, %c0_5, %c0_6, %c0_7] : memref<1x16x16x4xf32, #tpu.memory_space<vmem>>, vector<1x16x16x4xf32>
    %14 = vector.shape_cast %13 : vector<1x16x16x4xf32> to vector<16x16x4xf32>
    %15 = arith.truncf %14 : vector<16x16x4xf32> to vector<16x16x4xbf16>
    %c0_8 = arith.constant 0 : index
    %c0_9 = arith.constant 0 : index
    %c0_10 = arith.constant 0 : index
    %c0_11 = arith.constant 0 : index
    %16 = vector.load %arg4[%c0_8, %c0_9, %c0_10, %c0_11] : memref<1x1x16x4xf32, #tpu.memory_space<vmem>>, vector<1x1x16x4xf32>
    %17 = vector.shape_cast %16 : vector<1x1x16x4xf32> to vector<1x16x4xf32>
    %18 = arith.truncf %17 : vector<1x16x4xf32> to vector<1x16x4xbf16>
    %19 = vector.broadcast %7 : bf16 to vector<1x16x4xbf16>
    %20 = arith.mulf %18, %19 : vector<1x16x4xbf16>
    %21 = tpu.concatenate %12, %15, %20 in 0 : vector<1x16x4xbf16>, vector<16x16x4xbf16>, vector<1x16x4xbf16> -> vector<18x16x4xbf16>
    %cst = arith.constant 0.000000e+00 : bf16
    %22 = vector.broadcast %cst : bf16 to vector<18x1x4xbf16>
    %23 = vector.extract_strided_slice %21 {offsets = [0, 0, 0], sizes = [18, 15, 4], strides = [1, 1, 1]} : vector<18x16x4xbf16> to vector<18x15x4xbf16>
    %24 = tpu.concatenate %22, %23 in 1 : vector<18x1x4xbf16>, vector<18x15x4xbf16> -> vector<18x16x4xbf16>
    %25 = vector.extract_strided_slice %21 {offsets = [0, 1, 0], sizes = [18, 15, 4], strides = [1, 1, 1]} : vector<18x16x4xbf16> to vector<18x15x4xbf16>
    %26 = tpu.concatenate %25, %22 in 1 : vector<18x15x4xbf16>, vector<18x1x4xbf16> -> vector<18x16x4xbf16>
    %27 = tpu.concatenate %24, %21, %26 in 2 : vector<18x16x4xbf16>, vector<18x16x4xbf16>, vector<18x16x4xbf16> -> vector<18x16x12xbf16>
    %cst_12 = arith.constant 0.000000e+00 : f32
    %28 = vector.broadcast %cst_12 : f32 to vector<16x16x16xf32>
    %29 = vector.extract_strided_slice %27 {offsets = [0, 0, 0], sizes = [16, 16, 12], strides = [1, 1, 1]} : vector<18x16x12xbf16> to vector<16x16x12xbf16>
    %c0_13 = arith.constant 0 : index
    %c0_14 = arith.constant 0 : index
    %c0_15 = arith.constant 0 : index
    %30 = vector.load %arg5[%c0_13, %c0_14, %c0_15] : memref<3x12x16xbf16, #tpu.memory_space<vmem>>, vector<1x12x16xbf16>
    %31 = vector.shape_cast %30 : vector<1x12x16xbf16> to vector<12x16xbf16>
    %cst_16 = arith.constant dense<0.000000e+00> : vector<16x16x16xf32>
    %32 = tpu.matmul %29, %31, %cst_16 {dimension_numbers = #tpu.dot_dimension_numbers<[2], [0], [0, 1], [1], [0, 0, 0, 1, 1, 1], [], []>} : vector<16x16x12xbf16>, vector<12x16xbf16>, vector<16x16x16xf32> -> vector<16x16x16xf32>
    %33 = arith.addf %28, %32 : vector<16x16x16xf32>
    %34 = vector.extract_strided_slice %27 {offsets = [1, 0, 0], sizes = [16, 16, 12], strides = [1, 1, 1]} : vector<18x16x12xbf16> to vector<16x16x12xbf16>
    %c1 = arith.constant 1 : index
    %c0_17 = arith.constant 0 : index
    %c0_18 = arith.constant 0 : index
    %35 = vector.load %arg5[%c1, %c0_17, %c0_18] : memref<3x12x16xbf16, #tpu.memory_space<vmem>>, vector<1x12x16xbf16>
    %36 = vector.shape_cast %35 : vector<1x12x16xbf16> to vector<12x16xbf16>
    %cst_19 = arith.constant dense<0.000000e+00> : vector<16x16x16xf32>
    %37 = tpu.matmul %34, %36, %cst_19 {dimension_numbers = #tpu.dot_dimension_numbers<[2], [0], [0, 1], [1], [0, 0, 0, 1, 1, 1], [], []>} : vector<16x16x12xbf16>, vector<12x16xbf16>, vector<16x16x16xf32> -> vector<16x16x16xf32>
    %38 = arith.addf %33, %37 : vector<16x16x16xf32>
    %39 = vector.extract_strided_slice %27 {offsets = [2, 0, 0], sizes = [16, 16, 12], strides = [1, 1, 1]} : vector<18x16x12xbf16> to vector<16x16x12xbf16>
    %c2 = arith.constant 2 : index
    %c0_20 = arith.constant 0 : index
    %c0_21 = arith.constant 0 : index
    %40 = vector.load %arg5[%c2, %c0_20, %c0_21] : memref<3x12x16xbf16, #tpu.memory_space<vmem>>, vector<1x12x16xbf16>
    %41 = vector.shape_cast %40 : vector<1x12x16xbf16> to vector<12x16xbf16>
    %cst_22 = arith.constant dense<0.000000e+00> : vector<16x16x16xf32>
    %42 = tpu.matmul %39, %41, %cst_22 {dimension_numbers = #tpu.dot_dimension_numbers<[2], [0], [0, 1], [1], [0, 0, 0, 1, 1, 1], [], []>} : vector<16x16x12xbf16>, vector<12x16xbf16>, vector<16x16x16xf32> -> vector<16x16x16xf32>
    %43 = arith.addf %38, %42 : vector<16x16x16xf32>
    %c0_23 = arith.constant 0 : index
    %c0_24 = arith.constant 0 : index
    %44 = vector.load %arg6[%c0_23, %c0_24] : memref<1x16xf32, #tpu.memory_space<vmem>>, vector<1x16xf32>
    %45 = vector.shape_cast %44 : vector<1x16xf32> to vector<1x1x16xf32>
    %46 = vector.broadcast %45 : vector<1x1x16xf32> to vector<16x16x16xf32>
    %47 = arith.addf %43, %46 : vector<16x16x16xf32>
    %cst_25 = arith.constant 0.000000e+00 : f32
    %48 = vector.broadcast %cst_25 : f32 to vector<16x16x16xf32>
    %49 = arith.maximumf %47, %48 : vector<16x16x16xf32>
    %50 = vector.extract_strided_slice %49 {offsets = [0, 0, 0], sizes = [16, 16, 8], strides = [1, 1, 1]} : vector<16x16x16xf32> to vector<16x16x8xf32>
    %51 = arith.truncf %50 : vector<16x16x8xf32> to vector<16x16x8xbf16>
    %c0_26 = arith.constant 0 : index
    %c0_27 = arith.constant 0 : index
    %c0_28 = arith.constant 0 : index
    %c0_29 = arith.constant 0 : index
    %c0_30 = arith.constant 0 : index
    %52 = vector.load %arg7[%c0_26, %c0_27, %c0_28, %c0_29, %c0_30] : memref<1x16x2x16x8xbf16, #tpu.memory_space<vmem>>, vector<1x16x1x16x8xbf16>
    %53 = vector.shape_cast %52 : vector<1x16x1x16x8xbf16> to vector<16x16x8xbf16>
    %54 = vector.shape_cast %51 : vector<16x16x8xbf16> to vector<1x16x1x16x8xbf16>
    tpu.vector_store %arg7[%c0_26, %c0_27, %c0_28, %c0_29, %c0_30], %54 {strides = array<i32>} : memref<1x16x2x16x8xbf16, #tpu.memory_space<vmem>>, vector<1x16x1x16x8xbf16>,
    %55 = vector.extract_strided_slice %49 {offsets = [0, 0, 8], sizes = [16, 16, 8], strides = [1, 1, 1]} : vector<16x16x16xf32> to vector<16x16x8xf32>
    %56 = arith.truncf %55 : vector<16x16x8xf32> to vector<16x16x8xbf16>
    %c0_31 = arith.constant 0 : index
    %c0_32 = arith.constant 0 : index
    %c1_33 = arith.constant 1 : index
    %c0_34 = arith.constant 0 : index
    %c0_35 = arith.constant 0 : index
    %57 = vector.load %arg7[%c0_31, %c0_32, %c1_33, %c0_34, %c0_35] : memref<1x16x2x16x8xbf16, #tpu.memory_space<vmem>>, vector<1x16x1x16x8xbf16>
    %58 = vector.shape_cast %57 : vector<1x16x1x16x8xbf16> to vector<16x16x8xbf16>
    %59 = vector.shape_cast %56 : vector<16x16x8xbf16> to vector<1x16x1x16x8xbf16>
    tpu.vector_store %arg7[%c0_31, %c0_32, %c1_33, %c0_34, %c0_35], %59 {strides = array<i32>} : memref<1x16x2x16x8xbf16, #tpu.memory_space<vmem>>, vector<1x16x1x16x8xbf16>,
    return
  }
  func.func @transform_0(%arg0: i32, %arg1: i32) -> (i32, i32, i32, i32) {
    %c0_i32 = arith.constant 0 : i32
    %c0_i32_0 = arith.constant 0 : i32
    %c0_i32_1 = arith.constant 0 : i32
    return %arg0, %arg1, %c0_i32, %c0_i32_0 : i32, i32, i32, i32
  }
  func.func @transform_1(%arg0: i32, %arg1: i32) -> (i32, i32, i32, i32) {
    %c16_i32 = arith.constant 16 : i32
    %0 = arith.muli %arg1, %c16_i32 : i32
    %c1_i32 = arith.constant 1 : i32
    %1 = arith.subi %0, %c1_i32 : i32
    %c0_i32 = arith.constant 0 : i32
    %2 = arith.maxsi %1, %c0_i32 : i32
    %c0_i32_0 = arith.constant 0 : i32
    %c0_i32_1 = arith.constant 0 : i32
    %c0_i32_2 = arith.constant 0 : i32
    return %arg0, %2, %c0_i32_0, %c0_i32_1 : i32, i32, i32, i32
  }
  func.func @transform_2(%arg0: i32, %arg1: i32) -> (i32, i32, i32, i32) {
    %c16_i32 = arith.constant 16 : i32
    %0 = arith.muli %arg1, %c16_i32 : i32
    %c16_i32_0 = arith.constant 16 : i32
    %1 = arith.addi %0, %c16_i32_0 : i32
    %c15_i32 = arith.constant 15 : i32
    %2 = arith.minsi %1, %c15_i32 : i32
    %c0_i32 = arith.constant 0 : i32
    %c0_i32_1 = arith.constant 0 : i32
    %c0_i32_2 = arith.constant 0 : i32
    return %arg0, %2, %c0_i32, %c0_i32_1 : i32, i32, i32, i32
  }
  func.func @transform_3(%arg0: i32, %arg1: i32) -> (i32, i32, i32) {
    %c0_i32 = arith.constant 0 : i32
    %c0_i32_0 = arith.constant 0 : i32
    %c0_i32_1 = arith.constant 0 : i32
    %c0_i32_2 = arith.constant 0 : i32
    return %c0_i32, %c0_i32_0, %c0_i32_1 : i32, i32, i32
  }
  func.func @transform_4(%arg0: i32, %arg1: i32) -> (i32, i32) {
    %c0_i32 = arith.constant 0 : i32
    %c0_i32_0 = arith.constant 0 : i32
    %c0_i32_1 = arith.constant 0 : i32
    return %c0_i32, %c0_i32_0 : i32, i32
  }
  func.func @transform_5(%arg0: i32, %arg1: i32) -> (i32, i32, i32, i32, i32) {
    %c0_i32 = arith.constant 0 : i32
    %c0_i32_0 = arith.constant 0 : i32
    %c0_i32_1 = arith.constant 0 : i32
    %c0_i32_2 = arith.constant 0 : i32
    return %arg0, %arg1, %c0_i32, %c0_i32_0, %c0_i32_1 : i32, i32, i32, i32, i32
  }
}

</mosaic_0001>

<llo_original>
// kernel: tpu_custom_call.1
$region0: #{tpu_custom_call.1}
  #allocation0 [shape = 'u32[]', space=smem, size = 0x4, offset = 0x4, fixed_abs, tag = 'smem constant byte address 0x4 - core index']
  #allocation1 [shape = 'u32[144,128]{1,0:T(1,128)}', space=vmem, size = 0x12000, scoped, tag = 'internal scratch']
  %s0 = inlined_call_operand.hbm [shape: f32[2,16,16,4], index: 0, kind: input, shape index: {}]
  %s1 = inlined_call_operand.hbm [shape: f32[2,16,16,4], index: 1, kind: input, shape index: {}]
  %s2 = inlined_call_operand.hbm [shape: f32[2,16,16,4], index: 2, kind: input, shape index: {}]
  %s3 = inlined_call_operand.hbm [shape: bf16[3,12,16], index: 3, kind: input, shape index: {}]
  %s4 = inlined_call_operand.hbm [shape: f32[1,16], index: 4, kind: input, shape index: {}]
  %s5 = inlined_call_operand.hbm [shape: bf16[2,16,2,16,8], index: 5, kind: output, shape index: {}]
  %s6 = sld [smem:[#allocation0]]
  $region73: #{tpu_custom_call.1} parent=0
    _
  %s8 = ssub.s32 1, %s6
  %s9 = scalar_select 0, %s8, %s6
  $region1: #{tpu_custom_call.1} parent=0
    #allocation2 [shape = 'u8[262144]{0}', space=vmem, size = 0x40000, scoped, tag = 'input window, operand 0']
    #allocation3 [shape = 's32[2]{0}', space=sflag, size = 0x8, scoped, tag = 'scoped memory for tpu_custom_call.1']
    #allocation4 [shape = 's32[2]{0}', space=sflag, size = 0x8, scoped, tag = 'scoped memory for tpu_custom_call.1']
    #allocation5 [shape = 'u8[16384]{0}', space=vmem, size = 0x4000, scoped, tag = 'input window, operand 1']
    #allocation6 [shape = 's32[2]{0}', space=sflag, size = 0x8, scoped, tag = 'scoped memory for tpu_custom_call.1']
    #allocation7 [shape = 'u8[16384]{0}', space=vmem, size = 0x4000, scoped, tag = 'input window, operand 2']
    #allocation8 [shape = 'u8[12288]{0}', space=vmem, size = 0x3000, scoped, tag = 'input window, operand 3, single buffered']
    #allocation9 [shape = 's32[1]{0}', space=sflag, size = 0x4, scoped, tag = 'scoped memory for tpu_custom_call.1']
    #allocation10 [shape = 'u8[512]{0}', space=vmem, size = 0x400, scoped, tag = 'input window, operand 4, single buffered']
    #allocation11 [shape = 'u8[262144]{0}', space=vmem, size = 0x40000, scoped, tag = 'output window, operand 0']
    %10 = vsyncpa [#allocation3], 0
    %s11 = scalar_lea.sflag [#allocation3], 1
    %12 = vsyncpa %s11, 0
    %13 = vsyncpa [#allocation6], 0
    %s14 = scalar_lea.sflag [#allocation6], 1
    %15 = vsyncpa %s14, 0
    %16 = vsyncpa [#allocation9], 0
    %17 = vsyncpa [#allocation4], 0
    %s18 = scalar_lea.sflag [#allocation4], 1
    %19 = vsyncpa %s18, 0
    loop: start=0, step=1, limit=4
    $region2: #{tpu_custom_call.1} parent=1 // loop_pre_header
      _
    $region3: #{tpu_custom_call.1} parent=1 // loop_header
      %s21 = sphi 0, %s25
      %p22 = scmp.ge.s32.totalorder %s21, 4
      %s28 = sphi 0, %s40
      %s29 = sphi 0, %s36
      %s30 = sphi 0, %s28
      %s31 = sphi 0, %s29
      %s32 = sphi 0, %s30
      %s33 = sphi 0, %s31
      %s45 = sphi 0, %s47
      %s48 = sphi 0, %s45
      %s49 = sphi 0, %s48
      %s65 = sphi 0, %s49
      %s81 = sphi 0, %s83
      %s84 = sphi 0, %s81
      %s85 = sphi 0, %s84
      %s101 = sphi 0, %s85
      %s117 = sphi 0, %s119
      %s120 = sphi 0, %s117
      %s121 = sphi 0, %s120
      %s137 = sphi 0, %s121
      %s141 = sphi 0, %s141
      %s143 = sphi 0, %s141
      %s144 = sphi 0, %s143
      %s158 = sphi 0, %s144
      %s162 = sphi 0, %s162
      %s164 = sphi 0, %s162
      %s165 = sphi 0, %s164
      %s179 = sphi 0, %s165
      %s187 = sphi 0, %s189
      %s190 = sphi 0, %s187
      %s191 = sphi 0, %s190
      %s207 = sphi 0, %s191
    $region4: #{tpu_custom_call.1} parent=1 // loop_header_branch
      %24 = sbr.rel (%p22) target = $region8
    $region5: #{tpu_custom_call.1} parent=1 // loop_body
      %s26 = ssub.s32 %s21, 1
      %s27 = ssub.s32 %s21, 2
      %s34 = sadd.s32 1, %s29
      %p35 = scmp.ge.s32.totalorder %s34, 1
      %s36 = scalar_select %p35, 0, %s34
      %s37 = sadd.s32 1, %s28
      %s38 = scalar_select %p35, %s37, %s28
      %p39 = scmp.ge.s32.totalorder %s38, 2
      %s40 = scalar_select %p39, 0, %s38
      %s41 = ssub.s32 %s28, %s40
      %s42 = ssub.s32 %s29, %s36
      %s43 = sor.u32 %s41, %s42
      %p44 = scmp.eq.s32.totalorder %s43, 0
      %s46 = sadd.s32 %s45, 1
      %s47 = scalar_select %p44, %s45, %s46
      %p50 = pneg %p44
      %p51 = scmp.eq.s32.totalorder %s21, 1
      %p52 = por %p50, %p51
      %p53 = scmp.ne.s32.totalorder %s45, %s48
      %p54 = scmp.eq.s32.totalorder %s21, 0
      %p55 = por %p53, %p54
      %p56 = scmp.ne.s32.totalorder %s45, %s48
      %p57 = scmp.eq.s32.totalorder %s26, 1
      %p58 = por %p56, %p57
      %p59 = scmp.ne.s32.totalorder %s48, %s49
      %p60 = scmp.eq.s32.totalorder %s26, 0
      %p61 = por %p59, %p60
      %p62 = scmp.ne.s32.totalorder %s48, %s49
      %p63 = scmp.eq.s32.totalorder %s27, 1
      %p64 = por %p62, %p63
      %p66 = scmp.ne.s32.totalorder %s49, %s65
      %p67 = scmp.eq.s32.totalorder %s27, 0
      %p68 = por %p66, %p67
      %s69 = smul.u32 %s29, 16
      %s70 = ssub.s32 %s69, 1
      %p71 = scmp.gt.s32.totalorder %s70, 0
      %s72 = scalar_select %p71, %s70, 0
      %s73 = smul.u32 %s36, 16
      %s74 = ssub.s32 %s73, 1
      %p75 = scmp.gt.s32.totalorder %s74, 0
      %s76 = scalar_select %p75, %s74, 0
      %s77 = ssub.s32 %s28, %s40
      %s78 = ssub.s32 %s72, %s76
      %s79 = sor.u32 %s77, %s78
      %p80 = scmp.eq.s32.totalorder %s79, 0
      %s82 = sadd.s32 %s81, 1
      %s83 = scalar_select %p80, %s81, %s82
      %p86 = pneg %p80
      %p87 = scmp.eq.s32.totalorder %s21, 1
      %p88 = por %p86, %p87
      %p89 = scmp.ne.s32.totalorder %s81, %s84
      %p90 = scmp.eq.s32.totalorder %s21, 0
      %p91 = por %p89, %p90
      %p92 = scmp.ne.s32.totalorder %s81, %s84
      %p93 = scmp.eq.s32.totalorder %s26, 1
      %p94 = por %p92, %p93
      %p95 = scmp.ne.s32.totalorder %s84, %s85
      %p96 = scmp.eq.s32.totalorder %s26, 0
      %p97 = por %p95, %p96
      %p98 = scmp.ne.s32.totalorder %s84, %s85
      %p99 = scmp.eq.s32.totalorder %s27, 1
      %p100 = por %p98, %p99
      %p102 = scmp.ne.s32.totalorder %s85, %s101
      %p103 = scmp.eq.s32.totalorder %s27, 0
      %p104 = por %p102, %p103
      %s105 = smul.u32 %s29, 16
      %s106 = sadd.s32 %s105, 16
      %p107 = scmp.lt.s32.totalorder %s106, 15
      %s108 = scalar_select %p107, %s106, 15
      %s109 = smul.u32 %s36, 16
      %s110 = sadd.s32 %s109, 16
      %p111 = scmp.lt.s32.totalorder %s110, 15
      %s112 = scalar_select %p111, %s110, 15
      %s113 = ssub.s32 %s28, %s40
      %s114 = ssub.s32 %s108, %s112
      %s115 = sor.u32 %s113, %s114
      %p116 = scmp.eq.s32.totalorder %s115, 0
      %s118 = sadd.s32 %s117, 1
      %s119 = scalar_select %p116, %s117, %s118
      %p122 = pneg %p116
      %p123 = scmp.eq.s32.totalorder %s21, 1
      %p124 = por %p122, %p123
      %p125 = scmp.ne.s32.totalorder %s117, %s120
      %p126 = scmp.eq.s32.totalorder %s21, 0
      %p127 = por %p125, %p126
      %p128 = scmp.ne.s32.totalorder %s117, %s120
      %p129 = scmp.eq.s32.totalorder %s26, 1
      %p130 = por %p128, %p129
      %p131 = scmp.ne.s32.totalorder %s120, %s121
      %p132 = scmp.eq.s32.totalorder %s26, 0
      %p133 = por %p131, %p132
      %p134 = scmp.ne.s32.totalorder %s120, %s121
      %p135 = scmp.eq.s32.totalorder %s27, 1
      %p136 = por %p134, %p135
      %p138 = scmp.ne.s32.totalorder %s121, %s137
      %p139 = scmp.eq.s32.totalorder %s27, 0
      %p140 = por %p138, %p139
      %s142 = sadd.s32 %s141, 1
      %p145 = scmp.eq.s32.totalorder %s21, 1
      %p146 = scmp.ne.s32.totalorder %s141, %s143
      %p147 = scmp.eq.s32.totalorder %s21, 0
      %p148 = por %p146, %p147
      %p149 = scmp.ne.s32.totalorder %s141, %s143
      %p150 = scmp.eq.s32.totalorder %s26, 1
      %p151 = por %p149, %p150
      %p152 = scmp.ne.s32.totalorder %s143, %s144
      %p153 = scmp.eq.s32.totalorder %s26, 0
      %p154 = por %p152, %p153
      %p155 = scmp.ne.s32.totalorder %s143, %s144
      %p156 = scmp.eq.s32.totalorder %s27, 1
      %p157 = por %p155, %p156
      %p159 = scmp.ne.s32.totalorder %s144, %s158
      %p160 = scmp.eq.s32.totalorder %s27, 0
      %p161 = por %p159, %p160
      %s163 = sadd.s32 %s162, 1
      %p166 = scmp.eq.s32.totalorder %s21, 1
      %p167 = scmp.ne.s32.totalorder %s162, %s164
      %p168 = scmp.eq.s32.totalorder %s21, 0
      %p169 = por %p167, %p168
      %p170 = scmp.ne.s32.totalorder %s162, %s164
      %p171 = scmp.eq.s32.totalorder %s26, 1
      %p172 = por %p170, %p171
      %p173 = scmp.ne.s32.totalorder %s164, %s165
      %p174 = scmp.eq.s32.totalorder %s26, 0
      %p175 = por %p173, %p174
      %p176 = scmp.ne.s32.totalorder %s164, %s165
      %p177 = scmp.eq.s32.totalorder %s27, 1
      %p178 = por %p176, %p177
      %p180 = scmp.ne.s32.totalorder %s165, %s179
      %p181 = scmp.eq.s32.totalorder %s27, 0
      %p182 = por %p180, %p181
      %s183 = ssub.s32 %s28, %s40
      %s184 = ssub.s32 %s29, %s36
      %s185 = sor.u32 %s183, %s184
      %p186 = scmp.eq.s32.totalorder %s185, 0
      %s188 = sadd.s32 %s187, 1
      %s189 = scalar_select %p186, %s187, %s188
      %p192 = pneg %p186
      %p193 = scmp.eq.s32.totalorder %s21, 1
      %p194 = por %p192, %p193
      %p195 = scmp.ne.s32.totalorder %s187, %s190
      %p196 = scmp.eq.s32.totalorder %s21, 0
      %p197 = por %p195, %p196
      %p198 = scmp.ne.s32.totalorder %s187, %s190
      %p199 = scmp.eq.s32.totalorder %s26, 1
      %p200 = por %p198, %p199
      %p201 = scmp.ne.s32.totalorder %s190, %s191
      %p202 = scmp.eq.s32.totalorder %s26, 0
      %p203 = por %p201, %p202
      %p204 = scmp.ne.s32.totalorder %s190, %s191
      %p205 = scmp.eq.s32.totalorder %s27, 1
      %p206 = por %p204, %p205
      %p208 = scmp.ne.s32.totalorder %s191, %s207
      %p209 = scmp.eq.s32.totalorder %s27, 0
      %p210 = por %p208, %p209
      %p211 = scmp.le.s32.totalorder 1, %s21
      %p212 = scmp.lt.s32.totalorder %s21, 3
      %p213 = pnand %p211, %p212
      %p214 = pneg %p213
      // Predicated region
      $region9: #{tpu_custom_call.1} parent=5 // pred_check
        _
      $region10: #{tpu_custom_call.1} parent=5 // pred_check_branch
        %216 = sbr.rel (%p213) target = $region12
      $region11: #{tpu_custom_call.1} parent=5 // pred_region
        %s217 = ssub.s32 %s21, 1
        // Predicated region
        $region13: #{tpu_custom_call.1} parent=11 // pred_check
          %p218 = pneg %p154
        $region14: #{tpu_custom_call.1} parent=11 // pred_check_branch
          %220 = sbr.rel (%p218) target = $region16
        $region15: #{tpu_custom_call.1} parent=11 // pred_region
          %s222 = ssub.s32 384, 384
          %223 = vsyncadd [#allocation9], %s222
          %s224 = sshll.u32 [#allocation8], 4
          %s225 = int_to_ptr.vmem [resolvable:$true] %s224
          %230 = dma.hbm_to_vmem [thread:$0]  %s3, 384, %s225, [#allocation9], 64, 64, 4
        $region16: #{tpu_custom_call.1} parent=11 // pred_fallthru
          _
        // Predicated region
        $region17: #{tpu_custom_call.1} parent=11 // pred_check
          %p231 = pneg %p175
        $region18: #{tpu_custom_call.1} parent=11 // pred_check_branch
          %233 = sbr.rel (%p231) target = $region20
        $region19: #{tpu_custom_call.1} parent=11 // pred_region
          %s235 = ssub.s32 16, 16
          %236 = vsyncadd [#allocation9], %s235
          %s238 = sshll.u32 [#allocation10], 4
          %s239 = int_to_ptr.vmem [resolvable:$true] %s238
          %241 = dma.hbm_to_vmem [thread:$0]  %s4, 16, %s239, [#allocation9]
        $region20: #{tpu_custom_call.1} parent=11 // pred_fallthru
          _
      $region12: #{tpu_custom_call.1} parent=5 // pred_fallthru
        _
      %p242 = scmp.lt.s32.totalorder %s21, 2
      // Predicated region
      $region21: #{tpu_custom_call.1} parent=5 // pred_check
        %p243 = pneg %p242
      $region22: #{tpu_custom_call.1} parent=5 // pred_check_branch
        %245 = sbr.rel (%p243) target = $region24
      $region23: #{tpu_custom_call.1} parent=5 // pred_region
        // Predicated region
        $region25: #{tpu_custom_call.1} parent=23 // pred_check
          %p246 = pneg %p55
        $region26: #{tpu_custom_call.1} parent=23 // pred_check_branch
          %248 = sbr.rel (%p246) target = $region28
        $region27: #{tpu_custom_call.1} parent=23 // pred_region
          %s249 = sand.u32 %s45, 1
          %s250 = scalar_lea.sflag [#allocation3], %s249
          %s251 = sand.u32 %s45, 1
          %s252 = smul.addr %s251, 256
          %s253 = scalar_lea.vmem [#allocation2], %s252
          %s254 = smul.u32 16, %s29
          %s256 = ssub.s32 4096, 4096
          %257 = vsyncadd %s250, %s256
          %s258 = smul.addr %s254, 2
          %s259 = smul.addr %s28, 32
          %s260 = sadd.s32 %s258, %s259
          %s261 = smul.addr %s260, 128
          %s262 = scalar_lea.hbm %s0, %s261
          %s263 = sshll.u32 %s253, 4
          %s264 = int_to_ptr.vmem [resolvable:$true] %s263
          %269 = dma.hbm_to_vmem [thread:$0]  %s262, 4096, %s264, %s250, 128, 128, 8
        $region28: #{tpu_custom_call.1} parent=23 // pred_fallthru
          _
        // Predicated region
        $region29: #{tpu_custom_call.1} parent=23 // pred_check
          %p270 = pneg %p91
        $region30: #{tpu_custom_call.1} parent=23 // pred_check_branch
          %272 = sbr.rel (%p270) target = $region32
        $region31: #{tpu_custom_call.1} parent=23 // pred_region
          %s273 = sand.u32 %s21, 1
          %s274 = scalar_lea.sflag [#allocation6], %s273
          %s275 = sand.u32 %s81, 1
          %s276 = smul.addr %s275, 16
          %s277 = scalar_lea.vmem [#allocation5], %s276
          %s278 = smul.u32 %s29, 16
          %s279 = ssub.s32 %s278, 1
          %p280 = scmp.gt.s32.totalorder %s279, 0
          %s281 = scalar_select %p280, %s279, 0
          %s283 = ssub.s32 256, 256
          %284 = vsyncadd %s274, %s283
          %s285 = smul.addr %s281, 2
          %s286 = smul.addr %s28, 32
          %s287 = sadd.s32 %s285, %s286
          %s288 = smul.addr %s287, 128
          %s289 = scalar_lea.hbm %s1, %s288
          %s290 = sshll.u32 %s277, 4
          %s291 = int_to_ptr.vmem [resolvable:$true] %s290
          %296 = dma.hbm_to_vmem [thread:$0]  %s289, 256, %s291, %s274, 128, 128, 8
        $region32: #{tpu_custom_call.1} parent=23 // pred_fallthru
          _
        // Predicated region
        $region33: #{tpu_custom_call.1} parent=23 // pred_check
          %p297 = pneg %p127
        $region34: #{tpu_custom_call.1} parent=23 // pred_check_branch
          %299 = sbr.rel (%p297) target = $region36
        $region35: #{tpu_custom_call.1} parent=23 // pred_region
          %s300 = sand.u32 %s21, 1
          %s301 = scalar_lea.sflag [#allocation6], %s300
          %s302 = sand.u32 %s117, 1
          %s303 = smul.addr %s302, 16
          %s304 = scalar_lea.vmem [#allocation7], %s303
          %s305 = smul.u32 %s29, 16
          %s306 = sadd.s32 %s305, 16
          %p307 = scmp.lt.s32.totalorder %s306, 15
          %s308 = scalar_select %p307, %s306, 15
          %s310 = ssub.s32 256, 256
          %311 = vsyncadd %s301, %s310
          %s312 = smul.addr %s308, 2
          %s313 = smul.addr %s28, 32
          %s314 = sadd.s32 %s312, %s313
          %s315 = smul.addr %s314, 128
          %s316 = scalar_lea.hbm %s2, %s315
          %s317 = sshll.u32 %s304, 4
          %s318 = int_to_ptr.vmem [resolvable:$true] %s317
          %323 = dma.hbm_to_vmem [thread:$0]  %s316, 256, %s318, %s301, 128, 128, 8
        $region36: #{tpu_custom_call.1} parent=23 // pred_fallthru
          _
      $region24: #{tpu_custom_call.1} parent=5 // pred_fallthru
        _
      %p324 = scmp.le.s32.totalorder 1, %s21
      %p325 = scmp.lt.s32.totalorder %s21, 3
      %p326 = pnand %p324, %p325
      %p327 = pneg %p326
      // Predicated region
      $region37: #{tpu_custom_call.1} parent=5 // pred_check
        _
      $region38: #{tpu_custom_call.1} parent=5 // pred_check_branch
        %329 = sbr.rel (%p326) target = $region40
      $region39: #{tpu_custom_call.1} parent=5 // pred_region
        %s330 = ssub.s32 %s21, 1
        %s331 = sand.u32 %s48, 1
        %s332 = scalar_lea.sflag [#allocation3], %s331
        %s333 = sand.u32 %s48, 1
        %s334 = smul.addr %s333, 256
        %s335 = scalar_lea.vmem [#allocation2], %s334
        // Predicated region
        $region41: #{tpu_custom_call.1} parent=39 // pred_check
          %p336 = pneg %p61
        $region42: #{tpu_custom_call.1} parent=39 // pred_check_branch
          %338 = sbr.rel (%p336) target = $region44
        $region43: #{tpu_custom_call.1} parent=39 // pred_region
          %339 = dma.done %s332, 4096
        $region44: #{tpu_custom_call.1} parent=39 // pred_fallthru
          _
        %s340 = sand.u32 %s26, 1
        %s341 = scalar_lea.sflag [#allocation6], %s340
        %s342 = sand.u32 %s84, 1
        %s343 = smul.addr %s342, 16
        %s344 = scalar_lea.vmem [#allocation5], %s343
        // Predicated region
        $region45: #{tpu_custom_call.1} parent=39 // pred_check
          %p345 = pneg %p97
        $region46: #{tpu_custom_call.1} parent=39 // pred_check_branch
          %347 = sbr.rel (%p345) target = $region48
        $region47: #{tpu_custom_call.1} parent=39 // pred_region
          %348 = dma.done %s341, 256
        $region48: #{tpu_custom_call.1} parent=39 // pred_fallthru
          _
        %s349 = sand.u32 %s26, 1
        %s350 = scalar_lea.sflag [#allocation6], %s349
        %s351 = sand.u32 %s120, 1
        %s352 = smul.addr %s351, 16
        %s353 = scalar_lea.vmem [#allocation7], %s352
        // Predicated region
        $region49: #{tpu_custom_call.1} parent=39 // pred_check
          %p354 = pneg %p133
        $region50: #{tpu_custom_call.1} parent=39 // pred_check_branch
          %356 = sbr.rel (%p354) target = $region52
        $region51: #{tpu_custom_call.1} parent=39 // pred_region
          %357 = dma.done %s350, 256
        $region52: #{tpu_custom_call.1} parent=39 // pred_fallthru
          _
        // Predicated region
        $region53: #{tpu_custom_call.1} parent=39 // pred_check
          %p358 = pneg %p154
        $region54: #{tpu_custom_call.1} parent=39 // pred_check_branch
          %360 = sbr.rel (%p358) target = $region56
        $region55: #{tpu_custom_call.1} parent=39 // pred_region
          %361 = dma.done [#allocation9], 384
        $region56: #{tpu_custom_call.1} parent=39 // pred_fallthru
          _
        // Predicated region
        $region57: #{tpu_custom_call.1} parent=39 // pred_check
          %p362 = pneg %p175
        $region58: #{tpu_custom_call.1} parent=39 // pred_check_branch
          %364 = sbr.rel (%p362) target = $region60
        $region59: #{tpu_custom_call.1} parent=39 // pred_region
          %365 = dma.done [#allocation9], 16
        $region60: #{tpu_custom_call.1} parent=39 // pred_fallthru
          _
        %s366 = sand.u32 %s48, 1
        %s367 = scalar_lea.sflag [#allocation3], %s366
        %s368 = sand.u32 %s48, 1
        %s369 = smul.addr %s368, 256
        %s370 = scalar_lea.vmem [#allocation2], %s369
        %p371 = pneg %p61
        %p372 = pneg %p58
        %s373 = sand.u32 %s26, 1
        %s374 = scalar_lea.sflag [#allocation6], %s373
        %s375 = sand.u32 %s84, 1
        %s376 = smul.addr %s375, 16
        %s377 = scalar_lea.vmem [#allocation5], %s376
        %p378 = pneg %p97
        %p379 = pneg %p94
        %s380 = sand.u32 %s26, 1
        %s381 = scalar_lea.sflag [#allocation6], %s380
        %s382 = sand.u32 %s120, 1
        %s383 = smul.addr %s382, 16
        %s384 = scalar_lea.vmem [#allocation7], %s383
        %p385 = pneg %p133
        %p386 = pneg %p130
        %p387 = pneg %p154
        %p388 = pneg %p151
        %p389 = pneg %p175
        %p390 = pneg %p172
        %p391 = pneg %p203
        %p392 = pneg %p200
        %s393 = sand.u32 %s190, 1
        %s394 = scalar_lea.sflag [#allocation4], %s393
        %s395 = sand.u32 %s190, 1
        %s396 = smul.addr %s395, 256
        %s397 = scalar_lea.vmem [#allocation11], %s396
        %s398 = smul.u32 16, %s31
        %s399 = smul.u32 %s31, 16
        %s400 = ssub.s32 %s399, 1
        %p401 = scmp.gt.s32.totalorder %s400, 0
        %s402 = scalar_select %p401, %s400, 0
        %s403 = smul.u32 %s31, 16
        %s404 = sadd.s32 %s403, 16
        %p405 = scmp.lt.s32.totalorder %s404, 15
        %s406 = scalar_select %p405, %s404, 15
        %s407 = smul.u32 16, %s31
        %p409 = scmp.gt.s32.totalorder %s31, 0
        %s410 = scalar_select %p409, 1, 0
        %s411 = scvt.s32.f32 %s410
        %p413 = scmp.ne.f32.partialorder %s411, %s411
        %s414 = sshrl.u32 %s411, 16
        %s415 = sand.u32 %s414, 1
        %s416 = sadd.s32 32767, %s415
        %s417 = sadd.s32 %s411, %s416
        %s418 = sand.u32 %s417, 4294901760
        %s419 = scalar_select %p413, 2143289344, %s418
        %s421 = sshrl.u32 %s419, 16
        %p422 = scmp.lt.s32.totalorder %s31, 0
        %s423 = scalar_select %p422, 1, 0
        %s424 = scvt.s32.f32 %s423
        %p426 = scmp.ne.f32.partialorder %s424, %s424
        %s427 = sshrl.u32 %s424, 16
        %s428 = sand.u32 %s427, 1
        %s429 = sadd.s32 32767, %s428
        %s430 = sadd.s32 %s424, %s429
        %s431 = sand.u32 %s430, 4294901760
        %s432 = scalar_select %p426, 2143289344, %s431
        %s434 = sshrl.u32 %s432, 16
        %v435 = vld [vmem:[%s344] sm:$0xff]
        %v436 = vld [vmem:[%s344 + $0x8] sm:$0xff]
        %v437 = vpack.c.bf16 %v436, %v435
        %s438 = sshll.u32 %s421, 16
        %s439 = sor.u32 %s421, %s438
        %v440 = vstv %s439
        %v442 = vmul.bf16 %v437, %v440
        %v443 = vld [vmem:[%s335] sm:$0xff]
        %v444 = vld [vmem:[%s335 + $0x8] sm:$0xff]
        %v445 = vld [vmem:[%s335 + $0x10] sm:$0xff]
        %v446 = vld [vmem:[%s335 + $0x18] sm:$0xff]
        %v447 = vld [vmem:[%s335 + $0x20] sm:$0xff]
        %v448 = vld [vmem:[%s335 + $0x28] sm:$0xff]
        %v449 = vld [vmem:[%s335 + $0x30] sm:$0xff]
        %v450 = vld [vmem:[%s335 + $0x38] sm:$0xff]
        %v451 = vld [vmem:[%s335 + $0x40] sm:$0xff]
        %v452 = vld [vmem:[%s335 + $0x48] sm:$0xff]
        %v453 = vld [vmem:[%s335 + $0x50] sm:$0xff]
        %v454 = vld [vmem:[%s335 + $0x58] sm:$0xff]
        %v455 = vld [vmem:[%s335 + $0x60] sm:$0xff]
        %v456 = vld [vmem:[%s335 + $0x68] sm:$0xff]
        %v457 = vld [vmem:[%s335 + $0x70] sm:$0xff]
        %v458 = vld [vmem:[%s335 + $0x78] sm:$0xff]
        %v459 = vld [vmem:[%s335 + $0x80] sm:$0xff]
        %v460 = vld [vmem:[%s335 + $0x88] sm:$0xff]
        %v461 = vld [vmem:[%s335 + $0x90] sm:$0xff]
        %v462 = vld [vmem:[%s335 + $0x98] sm:$0xff]
        %v463 = vld [vmem:[%s335 + $0xa0] sm:$0xff]
        %v464 = vld [vmem:[%s335 + $0xa8] sm:$0xff]
        %v465 = vld [vmem:[%s335 + $0xb0] sm:$0xff]
        %v466 = vld [vmem:[%s335 + $0xb8] sm:$0xff]
        %v467 = vld [vmem:[%s335 + $0xc0] sm:$0xff]
        %v468 = vld [vmem:[%s335 + $0xc8] sm:$0xff]
        %v469 = vld [vmem:[%s335 + $0xd0] sm:$0xff]
        %v470 = vld [vmem:[%s335 + $0xd8] sm:$0xff]
        %v471 = vld [vmem:[%s335 + $0xe0] sm:$0xff]
        %v472 = vld [vmem:[%s335 + $0xe8] sm:$0xff]
        %v473 = vld [vmem:[%s335 + $0xf0] sm:$0xff]
        %v474 = vld [vmem:[%s335 + $0xf8] sm:$0xff]
        %v475 = vpack.c.bf16 %v444, %v443
        %v476 = vpack.c.bf16 %v446, %v445
        %v477 = vpack.c.bf16 %v448, %v447
        %v478 = vpack.c.bf16 %v450, %v449
        %v479 = vpack.c.bf16 %v452, %v451
        %v480 = vpack.c.bf16 %v454, %v453
        %v481 = vpack.c.bf16 %v456, %v455
        %v482 = vpack.c.bf16 %v458, %v457
        %v483 = vpack.c.bf16 %v460, %v459
        %v484 = vpack.c.bf16 %v462, %v461
        %v485 = vpack.c.bf16 %v464, %v463
        %v486 = vpack.c.bf16 %v466, %v465
        %v487 = vpack.c.bf16 %v468, %v467
        %v488 = vpack.c.bf16 %v470, %v469
        %v489 = vpack.c.bf16 %v472, %v471
        %v490 = vpack.c.bf16 %v474, %v473
        %v491 = vld [vmem:[%s353] sm:$0xff]
        %v492 = vld [vmem:[%s353 + $0x8] sm:$0xff]
        %v493 = vpack.c.bf16 %v492, %v491
        %s494 = sshll.u32 %s434, 16
        %s495 = sor.u32 %s434, %s494
        %v496 = vstv %s495
        %v498 = vmul.bf16 %v493, %v496
        %v500 = vshrl.u32 %v442, 16
        %v502 = vrot.slane %v500, 7
        %v503 = vshll.u32 %v442, 16
        %v505 = vor.u32 %v502, %v503
        %v507 = vshrl.u32 %v475, 16
        %v509 = vrot.slane %v507, 7
        %v510 = vshll.u32 %v475, 16
        %v512 = vor.u32 %v509, %v510
        %v514 = vshrl.u32 %v476, 16
        %v516 = vrot.slane %v514, 7
        %v517 = vshll.u32 %v476, 16
        %v519 = vor.u32 %v516, %v517
        %v521 = vshrl.u32 %v477, 16
        %v523 = vrot.slane %v521, 7
        %v524 = vshll.u32 %v477, 16
        %v526 = vor.u32 %v523, %v524
        %v528 = vshrl.u32 %v478, 16
        %v530 = vrot.slane %v528, 7
        %v531 = vshll.u32 %v478, 16
        %v533 = vor.u32 %v530, %v531
        %v535 = vshrl.u32 %v479, 16
        %v537 = vrot.slane %v535, 7
        %v538 = vshll.u32 %v479, 16
        %v540 = vor.u32 %v537, %v538
        %v542 = vshrl.u32 %v480, 16
        %v544 = vrot.slane %v542, 7
        %v545 = vshll.u32 %v480, 16
        %v547 = vor.u32 %v544, %v545
        %v549 = vshrl.u32 %v481, 16
        %v551 = vrot.slane %v549, 7
        %v552 = vshll.u32 %v481, 16
        %v554 = vor.u32 %v551, %v552
        %v556 = vshrl.u32 %v482, 16
        %v558 = vrot.slane %v556, 7
        %v559 = vshll.u32 %v482, 16
        %v561 = vor.u32 %v558, %v559
        %v563 = vshrl.u32 %v483, 16
        %v565 = vrot.slane %v563, 7
        %v566 = vshll.u32 %v483, 16
        %v568 = vor.u32 %v565, %v566
        %v570 = vshrl.u32 %v484, 16
        %v572 = vrot.slane %v570, 7
        %v573 = vshll.u32 %v484, 16
        %v575 = vor.u32 %v572, %v573
        %v577 = vshrl.u32 %v485, 16
        %v579 = vrot.slane %v577, 7
        %v580 = vshll.u32 %v485, 16
        %v582 = vor.u32 %v579, %v580
        %v584 = vshrl.u32 %v486, 16
        %v586 = vrot.slane %v584, 7
        %v587 = vshll.u32 %v486, 16
        %v589 = vor.u32 %v586, %v587
        %v591 = vshrl.u32 %v487, 16
        %v593 = vrot.slane %v591, 7
        %v594 = vshll.u32 %v487, 16
        %v596 = vor.u32 %v593, %v594
        %v598 = vshrl.u32 %v488, 16
        %v600 = vrot.slane %v598, 7
        %v601 = vshll.u32 %v488, 16
        %v603 = vor.u32 %v600, %v601
        %v605 = vshrl.u32 %v489, 16
        %v607 = vrot.slane %v605, 7
        %v608 = vshll.u32 %v489, 16
        %v610 = vor.u32 %v607, %v608
        %v612 = vshrl.u32 %v490, 16
        %v614 = vrot.slane %v612, 7
        %v615 = vshll.u32 %v490, 16
        %v617 = vor.u32 %v614, %v615
        %v619 = vshrl.u32 %v498, 16
        %v621 = vrot.slane %v619, 7
        %v622 = vshll.u32 %v498, 16
        %v624 = vor.u32 %v621, %v622
        %vm643 = vcmask 1040384
        %vm644 = vsmask.f32 256
        %vm645 = vmand %vm643, %vm644
        %v646 = vsel %vm645, 0, %v505
        %v647 = vsel %vm645, 0, %v512
        %v648 = vsel %vm645, 0, %v519
        %v649 = vsel %vm645, 0, %v526
        %v650 = vsel %vm645, 0, %v533
        %v651 = vsel %vm645, 0, %v540
        %v652 = vsel %vm645, 0, %v547
        %v653 = vsel %vm645, 0, %v554
        %v654 = vsel %vm645, 0, %v561
        %v655 = vsel %vm645, 0, %v568
        %v656 = vsel %vm645, 0, %v575
        %v657 = vsel %vm645, 0, %v582
        %v658 = vsel %vm645, 0, %v589
        %v659 = vsel %vm645, 0, %v596
        %v660 = vsel %vm645, 0, %v603
        %v661 = vsel %vm645, 0, %v610
        %v662 = vsel %vm645, 0, %v617
        %v663 = vsel %vm645, 0, %v624
        %v664 = vrot.slane %v503, 1
        %v665 = vor.u32 %v500, %v664
        %v666 = vrot.slane %v510, 1
        %v667 = vor.u32 %v507, %v666
        %v668 = vrot.slane %v517, 1
        %v669 = vor.u32 %v514, %v668
        %v670 = vrot.slane %v524, 1
        %v671 = vor.u32 %v521, %v670
        %v672 = vrot.slane %v531, 1
        %v673 = vor.u32 %v528, %v672
        %v674 = vrot.slane %v538, 1
        %v675 = vor.u32 %v535, %v674
        %v676 = vrot.slane %v545, 1
        %v677 = vor.u32 %v542, %v676
        %v678 = vrot.slane %v552, 1
        %v679 = vor.u32 %v549, %v678
        %v680 = vrot.slane %v559, 1
        %v681 = vor.u32 %v556, %v680
        %v682 = vrot.slane %v566, 1
        %v683 = vor.u32 %v563, %v682
        %v684 = vrot.slane %v573, 1
        %v685 = vor.u32 %v570, %v684
        %v686 = vrot.slane %v580, 1
        %v687 = vor.u32 %v577, %v686
        %v688 = vrot.slane %v587, 1
        %v689 = vor.u32 %v584, %v688
        %v690 = vrot.slane %v594, 1
        %v691 = vor.u32 %v591, %v690
        %v692 = vrot.slane %v601, 1
        %v693 = vor.u32 %v598, %v692
        %v694 = vrot.slane %v608, 1
        %v695 = vor.u32 %v605, %v694
        %v696 = vrot.slane %v615, 1
        %v697 = vor.u32 %v612, %v696
        %v698 = vrot.slane %v622, 1
        %v699 = vor.u32 %v619, %v698
        %vm718 = vcmask 1047552
        %vm719 = vsmask.f32 7424
        %vm720 = vmand %vm718, %vm719
        %v721 = vsel %vm720, %v665, 0
        %v722 = vsel %vm720, %v667, 0
        %v723 = vsel %vm720, %v669, 0
        %v724 = vsel %vm720, %v671, 0
        %v725 = vsel %vm720, %v673, 0
        %v726 = vsel %vm720, %v675, 0
        %v727 = vsel %vm720, %v677, 0
        %v728 = vsel %vm720, %v679, 0
        %v729 = vsel %vm720, %v681, 0
        %v730 = vsel %vm720, %v683, 0
        %v731 = vsel %vm720, %v685, 0
        %v732 = vsel %vm720, %v687, 0
        %v733 = vsel %vm720, %v689, 0
        %v734 = vsel %vm720, %v691, 0
        %v735 = vsel %vm720, %v693, 0
        %v736 = vsel %vm720, %v695, 0
        %v737 = vsel %vm720, %v697, 0
        %v738 = vsel %vm720, %v699, 0
        %757 = vrot.lane.b32.xlu0 %v442, 4
        %v758 = vpop.permute.xlu0 %757
        %759 = vrot.lane.b32.xlu0 %v475, 4
        %v760 = vpop.permute.xlu0 %759
        %761 = vrot.lane.b32.xlu0 %v476, 4
        %v762 = vpop.permute.xlu0 %761
        %763 = vrot.lane.b32.xlu0 %v477, 4
        %v764 = vpop.permute.xlu0 %763
        %765 = vrot.lane.b32.xlu0 %v478, 4
        %v766 = vpop.permute.xlu0 %765
        %767 = vrot.lane.b32.xlu0 %v479, 4
        %v768 = vpop.permute.xlu0 %767
        %769 = vrot.lane.b32.xlu0 %v480, 4
        %v770 = vpop.permute.xlu0 %769
        %771 = vrot.lane.b32.xlu0 %v481, 4
        %v772 = vpop.permute.xlu0 %771
        %773 = vrot.lane.b32.xlu0 %v482, 4
        %v774 = vpop.permute.xlu0 %773
        %775 = vrot.lane.b32.xlu0 %v483, 4
        %v776 = vpop.permute.xlu0 %775
        %777 = vrot.lane.b32.xlu0 %v484, 4
        %v778 = vpop.permute.xlu0 %777
        %779 = vrot.lane.b32.xlu0 %v485, 4
        %v780 = vpop.permute.xlu0 %779
        %781 = vrot.lane.b32.xlu0 %v486, 4
        %v782 = vpop.permute.xlu0 %781
        %783 = vrot.lane.b32.xlu0 %v487, 4
        %v784 = vpop.permute.xlu0 %783
        %785 = vrot.lane.b32.xlu0 %v488, 4
        %v786 = vpop.permute.xlu0 %785
        %787 = vrot.lane.b32.xlu0 %v489, 4
        %v788 = vpop.permute.xlu0 %787
        %789 = vrot.lane.b32.xlu0 %v490, 4
        %v790 = vpop.permute.xlu0 %789
        %791 = vrot.lane.b32.xlu0 %v498, 4
        %v792 = vpop.permute.xlu0 %791
        %811 = vrot.lane.b32.xlu0 %v721, 8
        %v812 = vpop.permute.xlu0 %811
        %813 = vrot.lane.b32.xlu0 %v722, 8
        %v814 = vpop.permute.xlu0 %813
        %815 = vrot.lane.b32.xlu0 %v723, 8
        %v816 = vpop.permute.xlu0 %815
        %817 = vrot.lane.b32.xlu0 %v724, 8
        %v818 = vpop.permute.xlu0 %817
        %819 = vrot.lane.b32.xlu0 %v725, 8
        %v820 = vpop.permute.xlu0 %819
        %821 = vrot.lane.b32.xlu0 %v726, 8
        %v822 = vpop.permute.xlu0 %821
        %823 = vrot.lane.b32.xlu0 %v727, 8
        %v824 = vpop.permute.xlu0 %823
        %825 = vrot.lane.b32.xlu0 %v728, 8
        %v826 = vpop.permute.xlu0 %825
        %827 = vrot.lane.b32.xlu0 %v729, 8
        %v828 = vpop.permute.xlu0 %827
        %829 = vrot.lane.b32.xlu0 %v730, 8
        %v830 = vpop.permute.xlu0 %829
        %831 = vrot.lane.b32.xlu0 %v731, 8
        %v832 = vpop.permute.xlu0 %831
        %833 = vrot.lane.b32.xlu0 %v732, 8
        %v834 = vpop.permute.xlu0 %833
        %835 = vrot.lane.b32.xlu0 %v733, 8
        %v836 = vpop.permute.xlu0 %835
        %837 = vrot.lane.b32.xlu0 %v734, 8
        %v838 = vpop.permute.xlu0 %837
        %839 = vrot.lane.b32.xlu0 %v735, 8
        %v840 = vpop.permute.xlu0 %839
        %841 = vrot.lane.b32.xlu0 %v736, 8
        %v842 = vpop.permute.xlu0 %841
        %843 = vrot.lane.b32.xlu0 %v737, 8
        %v844 = vpop.permute.xlu0 %843
        %845 = vrot.lane.b32.xlu0 %v738, 8
        %v846 = vpop.permute.xlu0 %845
        %vm847 = vcmask 31744
        %v850 = vsel %vm847, %v646, %v758
        %v853 = vsel %vm847, %v647, %v760
        %v856 = vsel %vm847, %v648, %v762
        %v859 = vsel %vm847, %v649, %v764
        %v862 = vsel %vm847, %v650, %v766
        %v865 = vsel %vm847, %v651, %v768
        %v868 = vsel %vm847, %v652, %v770
        %v871 = vsel %vm847, %v653, %v772
        %v874 = vsel %vm847, %v654, %v774
        %v877 = vsel %vm847, %v655, %v776
        %v880 = vsel %vm847, %v656, %v778
        %v883 = vsel %vm847, %v657, %v780
        %v886 = vsel %vm847, %v658, %v782
        %v889 = vsel %vm847, %v659, %v784
        %v892 = vsel %vm847, %v660, %v786
        %v895 = vsel %vm847, %v661, %v788
        %v898 = vsel %vm847, %v662, %v790
        %v901 = vsel %vm847, %v663, %v792
        %vm902 = vcmask 64512
        %v904 = vsel %vm902, %v850, %v812
        %v906 = vsel %vm902, %v853, %v814
        %v908 = vsel %vm902, %v856, %v816
        %v910 = vsel %vm902, %v859, %v818
        %v912 = vsel %vm902, %v862, %v820
        %v914 = vsel %vm902, %v865, %v822
        %v916 = vsel %vm902, %v868, %v824
        %v918 = vsel %vm902, %v871, %v826
        %v920 = vsel %vm902, %v874, %v828
        %v922 = vsel %vm902, %v877, %v830
        %v924 = vsel %vm902, %v880, %v832
        %v926 = vsel %vm902, %v883, %v834
        %v928 = vsel %vm902, %v886, %v836
        %v930 = vsel %vm902, %v889, %v838
        %v932 = vsel %vm902, %v892, %v840
        %v934 = vsel %vm902, %v895, %v842
        %v936 = vsel %vm902, %v898, %v844
        %v938 = vsel %vm902, %v901, %v846
        %v939 = vld [vmem:[#allocation8] sm:$0xf]
        %v940 = vld [vmem:[#allocation8 + $0x4] sm:$0x3]
        %s941 = scalar_lea.vmem [#allocation8], 8
        %v942 = vld [vmem:[%s941] sm:$0xf]
        %v943 = vld [vmem:[%s941 + $0x4] sm:$0x3]
        %v946 = vunpack.c.l.b16 %v942
        %v947 = vunpack.c.l.b16 %v943
        %v948 = vpack.c.b16 %v947, %v946
        %vm949 = vcmask 97280
        %v950 = vsel %vm949, %v906, 0
        %v952 = vsel %vm949, %v908, 0
        %v954 = vsel %vm949, %v910, 0
        %v956 = vsel %vm949, %v912, 0
        %v958 = vsel %vm949, %v914, 0
        %v960 = vsel %vm949, %v916, 0
        %v962 = vsel %vm949, %v918, 0
        %v964 = vsel %vm949, %v920, 0
        %v966 = vsel %vm949, %v922, 0
        %v968 = vsel %vm949, %v924, 0
        %v970 = vsel %vm949, %v926, 0
        %v972 = vsel %vm949, %v928, 0
        %v974 = vsel %vm949, %v930, 0
        %v976 = vsel %vm949, %v932, 0
        %v978 = vsel %vm949, %v934, 0
        %v980 = vsel %vm949, %v936, 0
        %vm982 = vcmask 1045504
        %v984 = vsel %vm982, %v948, 0
        %986 = vmatprep.subr.bf16.mxu0 0
        %987 = vmatpush1.bf16.msra.mxu0 %v984
        %988 = vmatprep.subr.bf16.mxu0 0
        %989 = vmatpush1.bf16.msra.mxu0 0
        %990 = vmatprep.subr.bf16.mxu0 0
        %991 = vmatpush1.bf16.msra.mxu0 0
        %992 = vmatprep.subr.bf16.mxu0 0
        %993 = vmatpush1.bf16.msra.mxu0 0
        %994 = vmatprep.subr.bf16.mxu0 0
        %995 = vmatpush1.bf16.msra.mxu0 0
        %996 = vmatprep.subr.bf16.mxu0 0
        %997 = vmatpush1.bf16.msra.mxu0 0
        %998 = vmatprep.subr.bf16.mxu0 0
        %999 = vmatpush1.bf16.msra.mxu0 0
        %1000 = vmatprep.subr.bf16.mxu0 0
        %1001 = vmatpush1.bf16.msra.mxu0 0
        %1002 = vmatprep.subr.bf16.mxu0 0
        %1003 = vmatpush1.bf16.msra.mxu0 0
        %1004 = vmatprep.subr.bf16.mxu0 0
        %1005 = vmatpush1.bf16.msra.mxu0 0
        %1006 = vmatprep.subr.bf16.mxu0 0
        %1007 = vmatpush1.bf16.msra.mxu0 0
        %1008 = vmatprep.subr.bf16.mxu0 0
        %1009 = vmatpush1.bf16.msra.mxu0 0
        %1010 = vmatprep.subr.bf16.mxu0 0
        %1011 = vmatpush1.bf16.msra.mxu0 0
        %1012 = vmatprep.subr.bf16.mxu0 0
        %1013 = vmatpush1.bf16.msra.mxu0 0
        %1014 = vmatprep.subr.bf16.mxu0 0
        %1015 = vmatpush1.bf16.msra.mxu0 0
        %1016 = vmatprep.subr.bf16.mxu0 0
        %1017 = vmatpush1.bf16.msra.mxu0 0
        %1018 = vmatprep.mubr.bf16.mxu0 0
        %1019 = vmatmul.mubr.bf16.gmra.mrb[0].mxu0 %v950
        %v1020 = vpop.f32.mrb[0].mxu0
        %v1021 = vadd.f32 0.0, %v1020
        %v1022 = vpop.f32.mrb[0].mxu0
        %v1023 = vpop.f32.mrb[0].mxu0
        %v1024 = vadd.f32 0.0, %v1023
        %v1025 = vpop.f32.mrb[0].mxu0
        %1026 = vmatprep.mubr.bf16.mxu0 0
        %1027 = vmatmul.mubr.bf16.gmra.mrb[0].mxu0 %v952
        %v1028 = vpop.f32.mrb[0].mxu0
        %v1029 = vadd.f32 0.0, %v1028
        %v1030 = vpop.f32.mrb[0].mxu0
        %v1031 = vpop.f32.mrb[0].mxu0
        %v1032 = vadd.f32 0.0, %v1031
        %v1033 = vpop.f32.mrb[0].mxu0
        %1034 = vmatprep.mubr.bf16.mxu0 0
        %1035 = vmatmul.mubr.bf16.gmra.mrb[0].mxu0 %v954
        %v1036 = vpop.f32.mrb[0].mxu0
        %v1037 = vadd.f32 0.0, %v1036
        %v1038 = vpop.f32.mrb[0].mxu0
        %v1039 = vpop.f32.mrb[0].mxu0
        %v1040 = vadd.f32 0.0, %v1039
        %v1041 = vpop.f32.mrb[0].mxu0
        %1042 = vmatprep.mubr.bf16.mxu0 0
        %1043 = vmatmul.mubr.bf16.gmra.mrb[0].mxu0 %v956
        %v1044 = vpop.f32.mrb[0].mxu0
        %v1045 = vadd.f32 0.0, %v1044
        %v1046 = vpop.f32.mrb[0].mxu0
        %v1047 = vpop.f32.mrb[0].mxu0
        %v1048 = vadd.f32 0.0, %v1047
        %v1049 = vpop.f32.mrb[0].mxu0
        %1050 = vmatprep.mubr.bf16.mxu0 0
        %1051 = vmatmul.mubr.bf16.gmra.mrb[0].mxu0 %v958
        %v1052 = vpop.f32.mrb[0].mxu0
        %v1053 = vadd.f32 0.0, %v1052
        %v1054 = vpop.f32.mrb[0].mxu0
        %v1055 = vpop.f32.mrb[0].mxu0
        %v1056 = vadd.f32 0.0, %v1055
        %v1057 = vpop.f32.mrb[0].mxu0
        %1058 = vmatprep.mubr.bf16.mxu0 0
        %1059 = vmatmul.mubr.bf16.gmra.mrb[0].mxu0 %v960
        %v1060 = vpop.f32.mrb[0].mxu0
        %v1061 = vadd.f32 0.0, %v1060
        %v1062 = vpop.f32.mrb[0].mxu0
        %v1063 = vpop.f32.mrb[0].mxu0
        %v1064 = vadd.f32 0.0, %v1063
        %v1065 = vpop.f32.mrb[0].mxu0
        %1066 = vmatprep.mubr.bf16.mxu0 0
        %1067 = vmatmul.mubr.bf16.gmra.mrb[0].mxu0 %v962
        %v1068 = vpop.f32.mrb[0].mxu0
        %v1069 = vadd.f32 0.0, %v1068
        %v1070 = vpop.f32.mrb[0].mxu0
        %v1071 = vpop.f32.mrb[0].mxu0
        %v1072 = vadd.f32 0.0, %v1071
        %v1073 = vpop.f32.mrb[0].mxu0
        %1074 = vmatprep.mubr.bf16.mxu0 0
        %1075 = vmatmul.mubr.bf16.gmra.mrb[0].mxu0 %v964
        %v1076 = vpop.f32.mrb[0].mxu0
        %v1077 = vadd.f32 0.0, %v1076
        %v1078 = vpop.f32.mrb[0].mxu0
        %v1079 = vpop.f32.mrb[0].mxu0
        %v1080 = vadd.f32 0.0, %v1079
        %v1081 = vpop.f32.mrb[0].mxu0
        %1082 = vmatprep.mubr.bf16.mxu0 0
        %1083 = vmatmul.mubr.bf16.gmra.mrb[0].mxu0 %v966
        %v1084 = vpop.f32.mrb[0].mxu0
        %v1085 = vadd.f32 0.0, %v1084
        %v1086 = vpop.f32.mrb[0].mxu0
        %v1087 = vpop.f32.mrb[0].mxu0
        %v1088 = vadd.f32 0.0, %v1087
        %v1089 = vpop.f32.mrb[0].mxu0
        %1090 = vmatprep.mubr.bf16.mxu0 0
        %1091 = vmatmul.mubr.bf16.gmra.mrb[0].mxu0 %v968
        %v1092 = vpop.f32.mrb[0].mxu0
        %v1093 = vadd.f32 0.0, %v1092
        %v1094 = vpop.f32.mrb[0].mxu0
        %v1095 = vpop.f32.mrb[0].mxu0
        %v1096 = vadd.f32 0.0, %v1095
        %v1097 = vpop.f32.mrb[0].mxu0
        %1098 = vmatprep.mubr.bf16.mxu0 0
        %1099 = vmatmul.mubr.bf16.gmra.mrb[0].mxu0 %v970
        %v1100 = vpop.f32.mrb[0].mxu0
        %v1101 = vadd.f32 0.0, %v1100
        %v1102 = vpop.f32.mrb[0].mxu0
        %v1103 = vpop.f32.mrb[0].mxu0
        %v1104 = vadd.f32 0.0, %v1103
        %v1105 = vpop.f32.mrb[0].mxu0
        %1106 = vmatprep.mubr.bf16.mxu0 0
        %1107 = vmatmul.mubr.bf16.gmra.mrb[0].mxu0 %v972
        %v1108 = vpop.f32.mrb[0].mxu0
        %v1109 = vadd.f32 0.0, %v1108
        %v1110 = vpop.f32.mrb[0].mxu0
        %v1111 = vpop.f32.mrb[0].mxu0
        %v1112 = vadd.f32 0.0, %v1111
        %v1113 = vpop.f32.mrb[0].mxu0
        %1114 = vmatprep.mubr.bf16.mxu0 0
        %1115 = vmatmul.mubr.bf16.gmra.mrb[0].mxu0 %v974
        %v1116 = vpop.f32.mrb[0].mxu0
        %v1117 = vadd.f32 0.0, %v1116
        %v1118 = vpop.f32.mrb[0].mxu0
        %v1119 = vpop.f32.mrb[0].mxu0
        %v1120 = vadd.f32 0.0, %v1119
        %v1121 = vpop.f32.mrb[0].mxu0
        %1122 = vmatprep.mubr.bf16.mxu0 0
        %1123 = vmatmul.mubr.bf16.gmra.mrb[0].mxu0 %v976
        %v1124 = vpop.f32.mrb[0].mxu0
        %v1125 = vadd.f32 0.0, %v1124
        %v1126 = vpop.f32.mrb[0].mxu0
        %v1127 = vpop.f32.mrb[0].mxu0
        %v1128 = vadd.f32 0.0, %v1127
        %v1129 = vpop.f32.mrb[0].mxu0
        %1130 = vmatprep.mubr.bf16.mxu0 0
        %1131 = vmatmul.mubr.bf16.gmra.mrb[0].mxu0 %v978
        %v1132 = vpop.f32.mrb[0].mxu0
        %v1133 = vadd.f32 0.0, %v1132
        %v1134 = vpop.f32.mrb[0].mxu0
        %v1135 = vpop.f32.mrb[0].mxu0
        %v1136 = vadd.f32 0.0, %v1135
        %v1137 = vpop.f32.mrb[0].mxu0
        %1138 = vmatprep.mubr.bf16.mxu0 0
        %1139 = vmatmul.mubr.bf16.gmra.mrb[0].mxu0 %v980
        %v1140 = vpop.f32.mrb[0].mxu0
        %v1141 = vadd.f32 0.0, %v1140
        %v1142 = vpop.f32.mrb[0].mxu0
        %v1143 = vpop.f32.mrb[0].mxu0
        %v1144 = vadd.f32 0.0, %v1143
        %v1145 = vpop.f32.mrb[0].mxu0
        %1146 = vdwg.mxu0
        %v1149 = vunpack.c.l.b16 %v939
        %v1150 = vunpack.c.l.b16 %v940
        %v1151 = vpack.c.b16 %v1150, %v1149
        %v1152 = vsel %vm949, %v904, 0
        %v1155 = vsel %vm982, %v1151, 0
        %1157 = vmatprep.subr.bf16.mxu0 0
        %1158 = vmatpush1.bf16.msra.mxu0 %v1155
        %1159 = vmatprep.subr.bf16.mxu0 0
        %1160 = vmatpush1.bf16.msra.mxu0 0
        %1161 = vmatprep.subr.bf16.mxu0 0
        %1162 = vmatpush1.bf16.msra.mxu0 0
        %1163 = vmatprep.subr.bf16.mxu0 0
        %1164 = vmatpush1.bf16.msra.mxu0 0
        %1165 = vmatprep.subr.bf16.mxu0 0
        %1166 = vmatpush1.bf16.msra.mxu0 0
        %1167 = vmatprep.subr.bf16.mxu0 0
        %1168 = vmatpush1.bf16.msra.mxu0 0
        %1169 = vmatprep.subr.bf16.mxu0 0
        %1170 = vmatpush1.bf16.msra.mxu0 0
        %1171 = vmatprep.subr.bf16.mxu0 0
        %1172 = vmatpush1.bf16.msra.mxu0 0
        %1173 = vmatprep.subr.bf16.mxu0 0
        %1174 = vmatpush1.bf16.msra.mxu0 0
        %1175 = vmatprep.subr.bf16.mxu0 0
        %1176 = vmatpush1.bf16.msra.mxu0 0
        %1177 = vmatprep.subr.bf16.mxu0 0
        %1178 = vmatpush1.bf16.msra.mxu0 0
        %1179 = vmatprep.subr.bf16.mxu0 0
        %1180 = vmatpush1.bf16.msra.mxu0 0
        %1181 = vmatprep.subr.bf16.mxu0 0
        %1182 = vmatpush1.bf16.msra.mxu0 0
        %1183 = vmatprep.subr.bf16.mxu0 0
        %1184 = vmatpush1.bf16.msra.mxu0 0
        %1185 = vmatprep.subr.bf16.mxu0 0
        %1186 = vmatpush1.bf16.msra.mxu0 0
        %1187 = vmatprep.subr.bf16.mxu0 0
        %1188 = vmatpush1.bf16.msra.mxu0 0
        %1189 = vmatprep.mubr.bf16.mxu0 0
        %1190 = vmatmul.mubr.bf16.gmra.mrb[0].mxu0 %v1152
        %v1191 = vpop.f32.mrb[0].mxu0
        %v1192 = vadd.f32 %v1021, %v1191
        %v1193 = vpop.f32.mrb[0].mxu0
        %v1194 = vpop.f32.mrb[0].mxu0
        %v1195 = vadd.f32 %v1024, %v1194
        %v1196 = vpop.f32.mrb[0].mxu0
        %1197 = vmatprep.mubr.bf16.mxu0 0
        %1198 = vmatmul.mubr.bf16.gmra.mrb[0].mxu0 %v950
        %v1199 = vpop.f32.mrb[0].mxu0
        %v1200 = vadd.f32 %v1029, %v1199
        %v1201 = vpop.f32.mrb[0].mxu0
        %v1202 = vpop.f32.mrb[0].mxu0
        %v1203 = vadd.f32 %v1032, %v1202
        %v1204 = vpop.f32.mrb[0].mxu0
        %1205 = vmatprep.mubr.bf16.mxu0 0
        %1206 = vmatmul.mubr.bf16.gmra.mrb[0].mxu0 %v952
        %v1207 = vpop.f32.mrb[0].mxu0
        %v1208 = vadd.f32 %v1037, %v1207
        %v1209 = vpop.f32.mrb[0].mxu0
        %v1210 = vpop.f32.mrb[0].mxu0
        %v1211 = vadd.f32 %v1040, %v1210
        %v1212 = vpop.f32.mrb[0].mxu0
        %1213 = vmatprep.mubr.bf16.mxu0 0
        %1214 = vmatmul.mubr.bf16.gmra.mrb[0].mxu0 %v954
        %v1215 = vpop.f32.mrb[0].mxu0
        %v1216 = vadd.f32 %v1045, %v1215
        %v1217 = vpop.f32.mrb[0].mxu0
        %v1218 = vpop.f32.mrb[0].mxu0
        %v1219 = vadd.f32 %v1048, %v1218
        %v1220 = vpop.f32.mrb[0].mxu0
        %1221 = vmatprep.mubr.bf16.mxu0 0
        %1222 = vmatmul.mubr.bf16.gmra.mrb[0].mxu0 %v956
        %v1223 = vpop.f32.mrb[0].mxu0
        %v1224 = vadd.f32 %v1053, %v1223
        %v1225 = vpop.f32.mrb[0].mxu0
        %v1226 = vpop.f32.mrb[0].mxu0
        %v1227 = vadd.f32 %v1056, %v1226
        %v1228 = vpop.f32.mrb[0].mxu0
        %1229 = vmatprep.mubr.bf16.mxu0 0
        %1230 = vmatmul.mubr.bf16.gmra.mrb[0].mxu0 %v958
        %v1231 = vpop.f32.mrb[0].mxu0
        %v1232 = vadd.f32 %v1061, %v1231
        %v1233 = vpop.f32.mrb[0].mxu0
        %v1234 = vpop.f32.mrb[0].mxu0
        %v1235 = vadd.f32 %v1064, %v1234
        %v1236 = vpop.f32.mrb[0].mxu0
        %1237 = vmatprep.mubr.bf16.mxu0 0
        %1238 = vmatmul.mubr.bf16.gmra.mrb[0].mxu0 %v960
        %v1239 = vpop.f32.mrb[0].mxu0
        %v1240 = vadd.f32 %v1069, %v1239
        %v1241 = vpop.f32.mrb[0].mxu0
        %v1242 = vpop.f32.mrb[0].mxu0
        %v1243 = vadd.f32 %v1072, %v1242
        %v1244 = vpop.f32.mrb[0].mxu0
        %1245 = vmatprep.mubr.bf16.mxu0 0
        %1246 = vmatmul.mubr.bf16.gmra.mrb[0].mxu0 %v962
        %v1247 = vpop.f32.mrb[0].mxu0
        %v1248 = vadd.f32 %v1077, %v1247
        %v1249 = vpop.f32.mrb[0].mxu0
        %v1250 = vpop.f32.mrb[0].mxu0
        %v1251 = vadd.f32 %v1080, %v1250
        %v1252 = vpop.f32.mrb[0].mxu0
        %1253 = vmatprep.mubr.bf16.mxu0 0
        %1254 = vmatmul.mubr.bf16.gmra.mrb[0].mxu0 %v964
        %v1255 = vpop.f32.mrb[0].mxu0
        %v1256 = vadd.f32 %v1085, %v1255
        %v1257 = vpop.f32.mrb[0].mxu0
        %v1258 = vpop.f32.mrb[0].mxu0
        %v1259 = vadd.f32 %v1088, %v1258
        %v1260 = vpop.f32.mrb[0].mxu0
        %1261 = vmatprep.mubr.bf16.mxu0 0
        %1262 = vmatmul.mubr.bf16.gmra.mrb[0].mxu0 %v966
        %v1263 = vpop.f32.mrb[0].mxu0
        %v1264 = vadd.f32 %v1093, %v1263
        %v1265 = vpop.f32.mrb[0].mxu0
        %v1266 = vpop.f32.mrb[0].mxu0
        %v1267 = vadd.f32 %v1096, %v1266
        %v1268 = vpop.f32.mrb[0].mxu0
        %1269 = vmatprep.mubr.bf16.mxu0 0
        %1270 = vmatmul.mubr.bf16.gmra.mrb[0].mxu0 %v968
        %v1271 = vpop.f32.mrb[0].mxu0
        %v1272 = vadd.f32 %v1101, %v1271
        %v1273 = vpop.f32.mrb[0].mxu0
        %v1274 = vpop.f32.mrb[0].mxu0
        %v1275 = vadd.f32 %v1104, %v1274
        %v1276 = vpop.f32.mrb[0].mxu0
        %1277 = vmatprep.mubr.bf16.mxu0 0
        %1278 = vmatmul.mubr.bf16.gmra.mrb[0].mxu0 %v970
        %v1279 = vpop.f32.mrb[0].mxu0
        %v1280 = vadd.f32 %v1109, %v1279
        %v1281 = vpop.f32.mrb[0].mxu0
        %v1282 = vpop.f32.mrb[0].mxu0
        %v1283 = vadd.f32 %v1112, %v1282
        %v1284 = vpop.f32.mrb[0].mxu0
        %1285 = vmatprep.mubr.bf16.mxu0 0
        %1286 = vmatmul.mubr.bf16.gmra.mrb[0].mxu0 %v972
        %v1287 = vpop.f32.mrb[0].mxu0
        %v1288 = vadd.f32 %v1117, %v1287
        %v1289 = vpop.f32.mrb[0].mxu0
        %v1290 = vpop.f32.mrb[0].mxu0
        %v1291 = vadd.f32 %v1120, %v1290
        %v1292 = vpop.f32.mrb[0].mxu0
        %1293 = vmatprep.mubr.bf16.mxu0 0
        %1294 = vmatmul.mubr.bf16.gmra.mrb[0].mxu0 %v974
        %v1295 = vpop.f32.mrb[0].mxu0
        %v1296 = vadd.f32 %v1125, %v1295
        %v1297 = vpop.f32.mrb[0].mxu0
        %v1298 = vpop.f32.mrb[0].mxu0
        %v1299 = vadd.f32 %v1128, %v1298
        %v1300 = vpop.f32.mrb[0].mxu0
        %1301 = vmatprep.mubr.bf16.mxu0 0
        %1302 = vmatmul.mubr.bf16.gmra.mrb[0].mxu0 %v976
        %v1303 = vpop.f32.mrb[0].mxu0
        %v1304 = vadd.f32 %v1133, %v1303
        %v1305 = vpop.f32.mrb[0].mxu0
        %v1306 = vpop.f32.mrb[0].mxu0
        %v1307 = vadd.f32 %v1136, %v1306
        %v1308 = vpop.f32.mrb[0].mxu0
        %1309 = vmatprep.mubr.bf16.mxu0 0
        %1310 = vmatmul.mubr.bf16.gmra.mrb[0].mxu0 %v978
        %v1311 = vpop.f32.mrb[0].mxu0
        %v1312 = vadd.f32 %v1141, %v1311
        %v1313 = vpop.f32.mrb[0].mxu0
        %v1314 = vpop.f32.mrb[0].mxu0
        %v1315 = vadd.f32 %v1144, %v1314
        %v1316 = vpop.f32.mrb[0].mxu0
        %1317 = vdwg.mxu0
        %s1318 = scalar_lea.vmem [#allocation8], 16
        %v1319 = vld [vmem:[%s1318] sm:$0xf]
        %v1320 = vld [vmem:[%s1318 + $0x4] sm:$0x3]
        %v1323 = vunpack.c.l.b16 %v1319
        %v1324 = vunpack.c.l.b16 %v1320
        %v1325 = vpack.c.b16 %v1324, %v1323
        %v1326 = vsel %vm949, %v938, 0
        %v1329 = vsel %vm982, %v1325, 0
        %1331 = vmatprep.subr.bf16.mxu0 0
        %1332 = vmatpush1.bf16.msra.mxu0 %v1329
        %1333 = vmatprep.subr.bf16.mxu0 0
        %1334 = vmatpush1.bf16.msra.mxu0 0
        %1335 = vmatprep.subr.bf16.mxu0 0
        %1336 = vmatpush1.bf16.msra.mxu0 0
        %1337 = vmatprep.subr.bf16.mxu0 0
        %1338 = vmatpush1.bf16.msra.mxu0 0
        %1339 = vmatprep.subr.bf16.mxu0 0
        %1340 = vmatpush1.bf16.msra.mxu0 0
        %1341 = vmatprep.subr.bf16.mxu0 0
        %1342 = vmatpush1.bf16.msra.mxu0 0
        %1343 = vmatprep.subr.bf16.mxu0 0
        %1344 = vmatpush1.bf16.msra.mxu0 0
        %1345 = vmatprep.subr.bf16.mxu0 0
        %1346 = vmatpush1.bf16.msra.mxu0 0
        %1347 = vmatprep.subr.bf16.mxu0 0
        %1348 = vmatpush1.bf16.msra.mxu0 0
        %1349 = vmatprep.subr.bf16.mxu0 0
        %1350 = vmatpush1.bf16.msra.mxu0 0
        %1351 = vmatprep.subr.bf16.mxu0 0
        %1352 = vmatpush1.bf16.msra.mxu0 0
        %1353 = vmatprep.subr.bf16.mxu0 0
        %1354 = vmatpush1.bf16.msra.mxu0 0
        %1355 = vmatprep.subr.bf16.mxu0 0
        %1356 = vmatpush1.bf16.msra.mxu0 0
        %1357 = vmatprep.subr.bf16.mxu0 0
        %1358 = vmatpush1.bf16.msra.mxu0 0
        %1359 = vmatprep.subr.bf16.mxu0 0
        %1360 = vmatpush1.bf16.msra.mxu0 0
        %1361 = vmatprep.subr.bf16.mxu0 0
        %1362 = vmatpush1.bf16.msra.mxu0 0
        %1363 = vmatprep.mubr.bf16.mxu0 0
        %1364 = vmatmul.mubr.bf16.gmra.mrb[0].mxu0 %v952
        %v1365 = vpop.f32.mrb[0].mxu0
        %v1366 = vadd.f32 0.0, %v1365
        %v1367 = vpop.f32.mrb[0].mxu0
        %v1368 = vpop.f32.mrb[0].mxu0
        %v1369 = vadd.f32 0.0, %v1368
        %v1370 = vpop.f32.mrb[0].mxu0
        %1371 = vmatprep.mubr.bf16.mxu0 0
        %1372 = vmatmul.mubr.bf16.gmra.mrb[0].mxu0 %v954
        %v1373 = vpop.f32.mrb[0].mxu0
        %v1374 = vadd.f32 0.0, %v1373
        %v1375 = vpop.f32.mrb[0].mxu0
        %v1376 = vpop.f32.mrb[0].mxu0
        %v1377 = vadd.f32 0.0, %v1376
        %v1378 = vpop.f32.mrb[0].mxu0
        %1379 = vmatprep.mubr.bf16.mxu0 0
        %1380 = vmatmul.mubr.bf16.gmra.mrb[0].mxu0 %v956
        %v1381 = vpop.f32.mrb[0].mxu0
        %v1382 = vadd.f32 0.0, %v1381
        %v1383 = vpop.f32.mrb[0].mxu0
        %v1384 = vpop.f32.mrb[0].mxu0
        %v1385 = vadd.f32 0.0, %v1384
        %v1386 = vpop.f32.mrb[0].mxu0
        %1387 = vmatprep.mubr.bf16.mxu0 0
        %1388 = vmatmul.mubr.bf16.gmra.mrb[0].mxu0 %v958
        %v1389 = vpop.f32.mrb[0].mxu0
        %v1390 = vadd.f32 0.0, %v1389
        %v1391 = vpop.f32.mrb[0].mxu0
        %v1392 = vpop.f32.mrb[0].mxu0
        %v1393 = vadd.f32 0.0, %v1392
        %v1394 = vpop.f32.mrb[0].mxu0
        %1395 = vmatprep.mubr.bf16.mxu0 0
        %1396 = vmatmul.mubr.bf16.gmra.mrb[0].mxu0 %v960
        %v1397 = vpop.f32.mrb[0].mxu0
        %v1398 = vadd.f32 0.0, %v1397
        %v1399 = vpop.f32.mrb[0].mxu0
        %v1400 = vpop.f32.mrb[0].mxu0
        %v1401 = vadd.f32 0.0, %v1400
        %v1402 = vpop.f32.mrb[0].mxu0
        %1403 = vmatprep.mubr.bf16.mxu0 0
        %1404 = vmatmul.mubr.bf16.gmra.mrb[0].mxu0 %v962
        %v1405 = vpop.f32.mrb[0].mxu0
        %v1406 = vadd.f32 0.0, %v1405
        %v1407 = vpop.f32.mrb[0].mxu0
        %v1408 = vpop.f32.mrb[0].mxu0
        %v1409 = vadd.f32 0.0, %v1408
        %v1410 = vpop.f32.mrb[0].mxu0
        %1411 = vmatprep.mubr.bf16.mxu0 0
        %1412 = vmatmul.mubr.bf16.gmra.mrb[0].mxu0 %v964
        %v1413 = vpop.f32.mrb[0].mxu0
        %v1414 = vadd.f32 0.0, %v1413
        %v1415 = vpop.f32.mrb[0].mxu0
        %v1416 = vpop.f32.mrb[0].mxu0
        %v1417 = vadd.f32 0.0, %v1416
        %v1418 = vpop.f32.mrb[0].mxu0
        %1419 = vmatprep.mubr.bf16.mxu0 0
        %1420 = vmatmul.mubr.bf16.gmra.mrb[0].mxu0 %v966
        %v1421 = vpop.f32.mrb[0].mxu0
        %v1422 = vadd.f32 0.0, %v1421
        %v1423 = vpop.f32.mrb[0].mxu0
        %v1424 = vpop.f32.mrb[0].mxu0
        %v1425 = vadd.f32 0.0, %v1424
        %v1426 = vpop.f32.mrb[0].mxu0
        %1427 = vmatprep.mubr.bf16.mxu0 0
        %1428 = vmatmul.mubr.bf16.gmra.mrb[0].mxu0 %v968
        %v1429 = vpop.f32.mrb[0].mxu0
        %v1430 = vadd.f32 0.0, %v1429
        %v1431 = vpop.f32.mrb[0].mxu0
        %v1432 = vpop.f32.mrb[0].mxu0
        %v1433 = vadd.f32 0.0, %v1432
        %v1434 = vpop.f32.mrb[0].mxu0
        %1435 = vmatprep.mubr.bf16.mxu0 0
        %1436 = vmatmul.mubr.bf16.gmra.mrb[0].mxu0 %v970
        %v1437 = vpop.f32.mrb[0].mxu0
        %v1438 = vadd.f32 0.0, %v1437
        %v1439 = vpop.f32.mrb[0].mxu0
        %v1440 = vpop.f32.mrb[0].mxu0
        %v1441 = vadd.f32 0.0, %v1440
        %v1442 = vpop.f32.mrb[0].mxu0
        %1443 = vmatprep.mubr.bf16.mxu0 0
        %1444 = vmatmul.mubr.bf16.gmra.mrb[0].mxu0 %v972
        %v1445 = vpop.f32.mrb[0].mxu0
        %v1446 = vadd.f32 0.0, %v1445
        %v1447 = vpop.f32.mrb[0].mxu0
        %v1448 = vpop.f32.mrb[0].mxu0
        %v1449 = vadd.f32 0.0, %v1448
        %v1450 = vpop.f32.mrb[0].mxu0
        %1451 = vmatprep.mubr.bf16.mxu0 0
        %1452 = vmatmul.mubr.bf16.gmra.mrb[0].mxu0 %v974
        %v1453 = vpop.f32.mrb[0].mxu0
        %v1454 = vadd.f32 0.0, %v1453
        %v1455 = vpop.f32.mrb[0].mxu0
        %v1456 = vpop.f32.mrb[0].mxu0
        %v1457 = vadd.f32 0.0, %v1456
        %v1458 = vpop.f32.mrb[0].mxu0
        %1459 = vmatprep.mubr.bf16.mxu0 0
        %1460 = vmatmul.mubr.bf16.gmra.mrb[0].mxu0 %v976
        %v1461 = vpop.f32.mrb[0].mxu0
        %v1462 = vadd.f32 0.0, %v1461
        %v1463 = vpop.f32.mrb[0].mxu0
        %v1464 = vpop.f32.mrb[0].mxu0
        %v1465 = vadd.f32 0.0, %v1464
        %v1466 = vpop.f32.mrb[0].mxu0
        %1467 = vmatprep.mubr.bf16.mxu0 0
        %1468 = vmatmul.mubr.bf16.gmra.mrb[0].mxu0 %v978
        %v1469 = vpop.f32.mrb[0].mxu0
        %v1470 = vadd.f32 0.0, %v1469
        %v1471 = vpop.f32.mrb[0].mxu0
        %v1472 = vpop.f32.mrb[0].mxu0
        %v1473 = vadd.f32 0.0, %v1472
        %v1474 = vpop.f32.mrb[0].mxu0
        %1475 = vmatprep.mubr.bf16.mxu0 0
        %1476 = vmatmul.mubr.bf16.gmra.mrb[0].mxu0 %v980
        %v1477 = vpop.f32.mrb[0].mxu0
        %v1478 = vadd.f32 0.0, %v1477
        %v1479 = vpop.f32.mrb[0].mxu0
        %v1480 = vpop.f32.mrb[0].mxu0
        %v1481 = vadd.f32 0.0, %v1480
        %v1482 = vpop.f32.mrb[0].mxu0
        %1483 = vmatprep.mubr.bf16.mxu0 0
        %1484 = vmatmul.mubr.bf16.gmra.mrb[0].mxu0 %v1326
        %v1485 = vpop.f32.mrb[0].mxu0
        %v1486 = vadd.f32 0.0, %v1485
        %v1487 = vpop.f32.mrb[0].mxu0
        %v1488 = vpop.f32.mrb[0].mxu0
        %v1489 = vadd.f32 0.0, %v1488
        %v1490 = vpop.f32.mrb[0].mxu0
        %1491 = vdwg.mxu0
        %v1492 = vadd.f32 %v1192, %v1366
        %v1493 = vadd.f32 %v1195, %v1369
        %v1494 = vadd.f32 %v1200, %v1374
        %v1495 = vadd.f32 %v1203, %v1377
        %v1496 = vadd.f32 %v1208, %v1382
        %v1497 = vadd.f32 %v1211, %v1385
        %v1498 = vadd.f32 %v1216, %v1390
        %v1499 = vadd.f32 %v1219, %v1393
        %v1500 = vadd.f32 %v1224, %v1398
        %v1501 = vadd.f32 %v1227, %v1401
        %v1502 = vadd.f32 %v1232, %v1406
        %v1503 = vadd.f32 %v1235, %v1409
        %v1504 = vadd.f32 %v1240, %v1414
        %v1505 = vadd.f32 %v1243, %v1417
        %v1506 = vadd.f32 %v1248, %v1422
        %v1507 = vadd.f32 %v1251, %v1425
        %v1508 = vadd.f32 %v1256, %v1430
        %v1509 = vadd.f32 %v1259, %v1433
        %v1510 = vadd.f32 %v1264, %v1438
        %v1511 = vadd.f32 %v1267, %v1441
        %v1512 = vadd.f32 %v1272, %v1446
        %v1513 = vadd.f32 %v1275, %v1449
        %v1514 = vadd.f32 %v1280, %v1454
        %v1515 = vadd.f32 %v1283, %v1457
        %v1516 = vadd.f32 %v1288, %v1462
        %v1517 = vadd.f32 %v1291, %v1465
        %v1518 = vadd.f32 %v1296, %v1470
        %v1519 = vadd.f32 %v1299, %v1473
        %v1520 = vadd.f32 %v1304, %v1478
        %v1521 = vadd.f32 %v1307, %v1481
        %v1522 = vadd.f32 %v1312, %v1486
        %v1523 = vadd.f32 %v1315, %v1489
        %v1524 = vld [vmem:[#allocation10] sm:$0x1]
        %v1526 = vlaneseq
        %v1527 = vshrl.u32 %v1526, 7
        %v1528 = vsub.s32 0, %v1527
        %v1529 = vrot.slane %v1524, %v1528
        %v1531 = vadd.f32 %v1492, %v1529
        %v1532 = vadd.f32 %v1493, %v1529
        %v1533 = vadd.f32 %v1494, %v1529
        %v1534 = vadd.f32 %v1495, %v1529
        %v1535 = vadd.f32 %v1496, %v1529
        %v1536 = vadd.f32 %v1497, %v1529
        %v1537 = vadd.f32 %v1498, %v1529
        %v1538 = vadd.f32 %v1499, %v1529
        %v1539 = vadd.f32 %v1500, %v1529
        %v1540 = vadd.f32 %v1501, %v1529
        %v1541 = vadd.f32 %v1502, %v1529
        %v1542 = vadd.f32 %v1503, %v1529
        %v1543 = vadd.f32 %v1504, %v1529
        %v1544 = vadd.f32 %v1505, %v1529
        %v1545 = vadd.f32 %v1506, %v1529
        %v1546 = vadd.f32 %v1507, %v1529
        %v1547 = vadd.f32 %v1508, %v1529
        %v1548 = vadd.f32 %v1509, %v1529
        %v1549 = vadd.f32 %v1510, %v1529
        %v1550 = vadd.f32 %v1511, %v1529
        %v1551 = vadd.f32 %v1512, %v1529
        %v1552 = vadd.f32 %v1513, %v1529
        %v1553 = vadd.f32 %v1514, %v1529
        %v1554 = vadd.f32 %v1515, %v1529
        %v1555 = vadd.f32 %v1516, %v1529
        %v1556 = vadd.f32 %v1517, %v1529
        %v1557 = vadd.f32 %v1518, %v1529
        %v1558 = vadd.f32 %v1519, %v1529
        %v1559 = vadd.f32 %v1520, %v1529
        %v1560 = vadd.f32 %v1521, %v1529
        %v1561 = vadd.f32 %v1522, %v1529
        %v1562 = vadd.f32 %v1523, %v1529
        %v1563 = vmax.f32 %v1531, 0.0
        %v1564 = vmax.f32 %v1532, 0.0
        %v1565 = vmax.f32 %v1533, 0.0
        %v1566 = vmax.f32 %v1534, 0.0
        %v1567 = vmax.f32 %v1535, 0.0
        %v1568 = vmax.f32 %v1536, 0.0
        %v1569 = vmax.f32 %v1537, 0.0
        %v1570 = vmax.f32 %v1538, 0.0
        %v1571 = vmax.f32 %v1539, 0.0
        %v1572 = vmax.f32 %v1540, 0.0
        %v1573 = vmax.f32 %v1541, 0.0
        %v1574 = vmax.f32 %v1542, 0.0
        %v1575 = vmax.f32 %v1543, 0.0
        %v1576 = vmax.f32 %v1544, 0.0
        %v1577 = vmax.f32 %v1545, 0.0
        %v1578 = vmax.f32 %v1546, 0.0
        %v1579 = vmax.f32 %v1547, 0.0
        %v1580 = vmax.f32 %v1548, 0.0
        %v1581 = vmax.f32 %v1549, 0.0
        %v1582 = vmax.f32 %v1550, 0.0
        %v1583 = vmax.f32 %v1551, 0.0
        %v1584 = vmax.f32 %v1552, 0.0
        %v1585 = vmax.f32 %v1553, 0.0
        %v1586 = vmax.f32 %v1554, 0.0
        %v1587 = vmax.f32 %v1555, 0.0
        %v1588 = vmax.f32 %v1556, 0.0
        %v1589 = vmax.f32 %v1557, 0.0
        %v1590 = vmax.f32 %v1558, 0.0
        %v1591 = vmax.f32 %v1559, 0.0
        %v1592 = vmax.f32 %v1560, 0.0
        %v1593 = vmax.f32 %v1561, 0.0
        %v1594 = vmax.f32 %v1562, 0.0
        %v1595 = vpack.c.bf16 %v1564, %v1563
        %v1596 = vpack.c.bf16 %v1566, %v1565
        %v1597 = vpack.c.bf16 %v1568, %v1567
        %v1598 = vpack.c.bf16 %v1570, %v1569
        %v1599 = vpack.c.bf16 %v1572, %v1571
        %v1600 = vpack.c.bf16 %v1574, %v1573
        %v1601 = vpack.c.bf16 %v1576, %v1575
        %v1602 = vpack.c.bf16 %v1578, %v1577
        %v1603 = vpack.c.bf16 %v1580, %v1579
        %v1604 = vpack.c.bf16 %v1582, %v1581
        %v1605 = vpack.c.bf16 %v1584, %v1583
        %v1606 = vpack.c.bf16 %v1586, %v1585
        %v1607 = vpack.c.bf16 %v1588, %v1587
        %v1608 = vpack.c.bf16 %v1590, %v1589
        %v1609 = vpack.c.bf16 %v1592, %v1591
        %v1610 = vpack.c.bf16 %v1594, %v1593
        %v1627 = vunpack.c.l.b16 %v1595
        %v1628 = vunpack.c.h.b16 %v1595
        %v1629 = vunpack.c.l.b16 %v1596
        %v1630 = vunpack.c.h.b16 %v1596
        %v1631 = vunpack.c.l.b16 %v1597
        %v1632 = vunpack.c.h.b16 %v1597
        %v1633 = vunpack.c.l.b16 %v1598
        %v1634 = vunpack.c.h.b16 %v1598
        %v1635 = vunpack.c.l.b16 %v1599
        %v1636 = vunpack.c.h.b16 %v1599
        %v1637 = vunpack.c.l.b16 %v1600
        %v1638 = vunpack.c.h.b16 %v1600
        %v1639 = vunpack.c.l.b16 %v1601
        %v1640 = vunpack.c.h.b16 %v1601
        %v1641 = vunpack.c.l.b16 %v1602
        %v1642 = vunpack.c.h.b16 %v1602
        %v1643 = vunpack.c.l.b16 %v1603
        %v1644 = vunpack.c.h.b16 %v1603
        %v1645 = vunpack.c.l.b16 %v1604
        %v1646 = vunpack.c.h.b16 %v1604
        %v1647 = vunpack.c.l.b16 %v1605
        %v1648 = vunpack.c.h.b16 %v1605
        %v1649 = vunpack.c.l.b16 %v1606
        %v1650 = vunpack.c.h.b16 %v1606
        %v1651 = vunpack.c.l.b16 %v1607
        %v1652 = vunpack.c.h.b16 %v1607
        %v1653 = vunpack.c.l.b16 %v1608
        %v1654 = vunpack.c.h.b16 %v1608
        %v1655 = vunpack.c.l.b16 %v1609
        %v1656 = vunpack.c.h.b16 %v1609
        %v1657 = vunpack.c.l.b16 %v1610
        %v1658 = vunpack.c.h.b16 %v1610
        %v1659 = vpack.c.b16 %v1627, %v1627
        %v1660 = vpack.c.b16 %v1628, %v1628
        %v1661 = vpack.c.b16 %v1629, %v1629
        %v1662 = vpack.c.b16 %v1630, %v1630
        %v1663 = vpack.c.b16 %v1631, %v1631
        %v1664 = vpack.c.b16 %v1632, %v1632
        %v1665 = vpack.c.b16 %v1633, %v1633
        %v1666 = vpack.c.b16 %v1634, %v1634
        %v1667 = vpack.c.b16 %v1635, %v1635
        %v1668 = vpack.c.b16 %v1636, %v1636
        %v1669 = vpack.c.b16 %v1637, %v1637
        %v1670 = vpack.c.b16 %v1638, %v1638
        %v1671 = vpack.c.b16 %v1639, %v1639
        %v1672 = vpack.c.b16 %v1640, %v1640
        %v1673 = vpack.c.b16 %v1641, %v1641
        %v1674 = vpack.c.b16 %v1642, %v1642
        %v1675 = vpack.c.b16 %v1643, %v1643
        %v1676 = vpack.c.b16 %v1644, %v1644
        %v1677 = vpack.c.b16 %v1645, %v1645
        %v1678 = vpack.c.b16 %v1646, %v1646
        %v1679 = vpack.c.b16 %v1647, %v1647
        %v1680 = vpack.c.b16 %v1648, %v1648
        %v1681 = vpack.c.b16 %v1649, %v1649
        %v1682 = vpack.c.b16 %v1650, %v1650
        %v1683 = vpack.c.b16 %v1651, %v1651
        %v1684 = vpack.c.b16 %v1652, %v1652
        %v1685 = vpack.c.b16 %v1653, %v1653
        %v1686 = vpack.c.b16 %v1654, %v1654
        %v1687 = vpack.c.b16 %v1655, %v1655
        %v1688 = vpack.c.b16 %v1656, %v1656
        %v1689 = vpack.c.b16 %v1657, %v1657
        %v1690 = vpack.c.b16 %v1658, %v1658
        %vm1723 = vcmask 60416
        %1724 = vst.msk [vmem:[%s397] sm:$0xf] %vm1723, %v1659
        %1725 = vst.msk [vmem:[%s397 + $0x4] sm:$0xf] %vm1723, %v1660
        %1726 = vst.msk [vmem:[%s397 + $0x10] sm:$0xf] %vm1723, %v1661
        %1727 = vst.msk [vmem:[%s397 + $0x14] sm:$0xf] %vm1723, %v1662
        %1728 = vst.msk [vmem:[%s397 + $0x20] sm:$0xf] %vm1723, %v1663
        %1729 = vst.msk [vmem:[%s397 + $0x24] sm:$0xf] %vm1723, %v1664
        %1730 = vst.msk [vmem:[%s397 + $0x30] sm:$0xf] %vm1723, %v1665
        %1731 = vst.msk [vmem:[%s397 + $0x34] sm:$0xf] %vm1723, %v1666
        %1732 = vst.msk [vmem:[%s397 + $0x40] sm:$0xf] %vm1723, %v1667
        %1733 = vst.msk [vmem:[%s397 + $0x44] sm:$0xf] %vm1723, %v1668
        %1734 = vst.msk [vmem:[%s397 + $0x50] sm:$0xf] %vm1723, %v1669
        %1735 = vst.msk [vmem:[%s397 + $0x54] sm:$0xf] %vm1723, %v1670
        %1736 = vst.msk [vmem:[%s397 + $0x60] sm:$0xf] %vm1723, %v1671
        %1737 = vst.msk [vmem:[%s397 + $0x64] sm:$0xf] %vm1723, %v1672
        %1738 = vst.msk [vmem:[%s397 + $0x70] sm:$0xf] %vm1723, %v1673
        %1739 = vst.msk [vmem:[%s397 + $0x74] sm:$0xf] %vm1723, %v1674
        %1740 = vst.msk [vmem:[%s397 + $0x80] sm:$0xf] %vm1723, %v1675
        %1741 = vst.msk [vmem:[%s397 + $0x84] sm:$0xf] %vm1723, %v1676
        %1742 = vst.msk [vmem:[%s397 + $0x90] sm:$0xf] %vm1723, %v1677
        %1743 = vst.msk [vmem:[%s397 + $0x94] sm:$0xf] %vm1723, %v1678
        %1744 = vst.msk [vmem:[%s397 + $0xa0] sm:$0xf] %vm1723, %v1679
        %1745 = vst.msk [vmem:[%s397 + $0xa4] sm:$0xf] %vm1723, %v1680
        %1746 = vst.msk [vmem:[%s397 + $0xb0] sm:$0xf] %vm1723, %v1681
        %1747 = vst.msk [vmem:[%s397 + $0xb4] sm:$0xf] %vm1723, %v1682
        %1748 = vst.msk [vmem:[%s397 + $0xc0] sm:$0xf] %vm1723, %v1683
        %1749 = vst.msk [vmem:[%s397 + $0xc4] sm:$0xf] %vm1723, %v1684
        %1750 = vst.msk [vmem:[%s397 + $0xd0] sm:$0xf] %vm1723, %v1685
        %1751 = vst.msk [vmem:[%s397 + $0xd4] sm:$0xf] %vm1723, %v1686
        %1752 = vst.msk [vmem:[%s397 + $0xe0] sm:$0xf] %vm1723, %v1687
        %1753 = vst.msk [vmem:[%s397 + $0xe4] sm:$0xf] %vm1723, %v1688
        %1754 = vst.msk [vmem:[%s397 + $0xf0] sm:$0xf] %vm1723, %v1689
        %1755 = vst.msk [vmem:[%s397 + $0xf4] sm:$0xf] %vm1723, %v1690
        %1756 = vrot.lane.b32.xlu0 %v1659, 120
        %v1757 = vpop.permute.xlu0 %1756
        %1758 = vrot.lane.b32.xlu0 %v1660, 120
        %v1759 = vpop.permute.xlu0 %1758
        %1760 = vrot.lane.b32.xlu0 %v1661, 120
        %v1761 = vpop.permute.xlu0 %1760
        %1762 = vrot.lane.b32.xlu0 %v1662, 120
        %v1763 = vpop.permute.xlu0 %1762
        %1764 = vrot.lane.b32.xlu0 %v1663, 120
        %v1765 = vpop.permute.xlu0 %1764
        %1766 = vrot.lane.b32.xlu0 %v1664, 120
        %v1767 = vpop.permute.xlu0 %1766
        %1768 = vrot.lane.b32.xlu0 %v1665, 120
        %v1769 = vpop.permute.xlu0 %1768
        %1770 = vrot.lane.b32.xlu0 %v1666, 120
        %v1771 = vpop.permute.xlu0 %1770
        %1772 = vrot.lane.b32.xlu0 %v1667, 120
        %v1773 = vpop.permute.xlu0 %1772
        %1774 = vrot.lane.b32.xlu0 %v1668, 120
        %v1775 = vpop.permute.xlu0 %1774
        %1776 = vrot.lane.b32.xlu0 %v1669, 120
        %v1777 = vpop.permute.xlu0 %1776
        %1778 = vrot.lane.b32.xlu0 %v1670, 120
        %v1779 = vpop.permute.xlu0 %1778
        %1780 = vrot.lane.b32.xlu0 %v1671, 120
        %v1781 = vpop.permute.xlu0 %1780
        %1782 = vrot.lane.b32.xlu0 %v1672, 120
        %v1783 = vpop.permute.xlu0 %1782
        %1784 = vrot.lane.b32.xlu0 %v1673, 120
        %v1785 = vpop.permute.xlu0 %1784
        %1786 = vrot.lane.b32.xlu0 %v1674, 120
        %v1787 = vpop.permute.xlu0 %1786
        %1788 = vrot.lane.b32.xlu0 %v1675, 120
        %v1789 = vpop.permute.xlu0 %1788
        %1790 = vrot.lane.b32.xlu0 %v1676, 120
        %v1791 = vpop.permute.xlu0 %1790
        %1792 = vrot.lane.b32.xlu0 %v1677, 120
        %v1793 = vpop.permute.xlu0 %1792
        %1794 = vrot.lane.b32.xlu0 %v1678, 120
        %v1795 = vpop.permute.xlu0 %1794
        %1796 = vrot.lane.b32.xlu0 %v1679, 120
        %v1797 = vpop.permute.xlu0 %1796
        %1798 = vrot.lane.b32.xlu0 %v1680, 120
        %v1799 = vpop.permute.xlu0 %1798
        %1800 = vrot.lane.b32.xlu0 %v1681, 120
        %v1801 = vpop.permute.xlu0 %1800
        %1802 = vrot.lane.b32.xlu0 %v1682, 120
        %v1803 = vpop.permute.xlu0 %1802
        %1804 = vrot.lane.b32.xlu0 %v1683, 120
        %v1805 = vpop.permute.xlu0 %1804
        %1806 = vrot.lane.b32.xlu0 %v1684, 120
        %v1807 = vpop.permute.xlu0 %1806
        %1808 = vrot.lane.b32.xlu0 %v1685, 120
        %v1809 = vpop.permute.xlu0 %1808
        %1810 = vrot.lane.b32.xlu0 %v1686, 120
        %v1811 = vpop.permute.xlu0 %1810
        %1812 = vrot.lane.b32.xlu0 %v1687, 120
        %v1813 = vpop.permute.xlu0 %1812
        %1814 = vrot.lane.b32.xlu0 %v1688, 120
        %v1815 = vpop.permute.xlu0 %1814
        %1816 = vrot.lane.b32.xlu0 %v1689, 120
        %v1817 = vpop.permute.xlu0 %1816
        %1818 = vrot.lane.b32.xlu0 %v1690, 120
        %v1819 = vpop.permute.xlu0 %1818
        %s1852 = scalar_lea.vmem %s397, 8 [#allocation11]
        %1853 = vst.msk [vmem:[%s1852] sm:$0xf] %vm1723, %v1757
        %1854 = vst.msk [vmem:[%s1852 + $0x4] sm:$0xf] %vm1723, %v1759
        %1855 = vst.msk [vmem:[%s1852 + $0x10] sm:$0xf] %vm1723, %v1761
        %1856 = vst.msk [vmem:[%s1852 + $0x14] sm:$0xf] %vm1723, %v1763
        %1857 = vst.msk [vmem:[%s1852 + $0x20] sm:$0xf] %vm1723, %v1765
        %1858 = vst.msk [vmem:[%s1852 + $0x24] sm:$0xf] %vm1723, %v1767
        %1859 = vst.msk [vmem:[%s1852 + $0x30] sm:$0xf] %vm1723, %v1769
        %1860 = vst.msk [vmem:[%s1852 + $0x34] sm:$0xf] %vm1723, %v1771
        %1861 = vst.msk [vmem:[%s1852 + $0x40] sm:$0xf] %vm1723, %v1773
        %1862 = vst.msk [vmem:[%s1852 + $0x44] sm:$0xf] %vm1723, %v1775
        %1863 = vst.msk [vmem:[%s1852 + $0x50] sm:$0xf] %vm1723, %v1777
        %1864 = vst.msk [vmem:[%s1852 + $0x54] sm:$0xf] %vm1723, %v1779
        %1865 = vst.msk [vmem:[%s1852 + $0x60] sm:$0xf] %vm1723, %v1781
        %1866 = vst.msk [vmem:[%s1852 + $0x64] sm:$0xf] %vm1723, %v1783
        %1867 = vst.msk [vmem:[%s1852 + $0x70] sm:$0xf] %vm1723, %v1785
        %1868 = vst.msk [vmem:[%s1852 + $0x74] sm:$0xf] %vm1723, %v1787
        %1869 = vst.msk [vmem:[%s1852 + $0x80] sm:$0xf] %vm1723, %v1789
        %1870 = vst.msk [vmem:[%s1852 + $0x84] sm:$0xf] %vm1723, %v1791
        %1871 = vst.msk [vmem:[%s1852 + $0x90] sm:$0xf] %vm1723, %v1793
        %1872 = vst.msk [vmem:[%s1852 + $0x94] sm:$0xf] %vm1723, %v1795
        %1873 = vst.msk [vmem:[%s1852 + $0xa0] sm:$0xf] %vm1723, %v1797
        %1874 = vst.msk [vmem:[%s1852 + $0xa4] sm:$0xf] %vm1723, %v1799
        %1875 = vst.msk [vmem:[%s1852 + $0xb0] sm:$0xf] %vm1723, %v1801
        %1876 = vst.msk [vmem:[%s1852 + $0xb4] sm:$0xf] %vm1723, %v1803
        %1877 = vst.msk [vmem:[%s1852 + $0xc0] sm:$0xf] %vm1723, %v1805
        %1878 = vst.msk [vmem:[%s1852 + $0xc4] sm:$0xf] %vm1723, %v1807
        %1879 = vst.msk [vmem:[%s1852 + $0xd0] sm:$0xf] %vm1723, %v1809
        %1880 = vst.msk [vmem:[%s1852 + $0xd4] sm:$0xf] %vm1723, %v1811
        %1881 = vst.msk [vmem:[%s1852 + $0xe0] sm:$0xf] %vm1723, %v1813
        %1882 = vst.msk [vmem:[%s1852 + $0xe4] sm:$0xf] %vm1723, %v1815
        %1883 = vst.msk [vmem:[%s1852 + $0xf0] sm:$0xf] %vm1723, %v1817
        %1884 = vst.msk [vmem:[%s1852 + $0xf4] sm:$0xf] %vm1723, %v1819
        %s1885 = sand.u32 %s190, 1
        %s1886 = scalar_lea.sflag [#allocation4], %s1885
        %s1887 = sand.u32 %s190, 1
        %s1888 = smul.addr %s1887, 256
        %s1889 = scalar_lea.vmem [#allocation11], %s1888
        // Predicated region
        $region61: #{tpu_custom_call.1} parent=39 // pred_check
          %p1890 = pneg %p200
        $region62: #{tpu_custom_call.1} parent=39 // pred_check_branch
          %1892 = sbr.rel (%p1890) target = $region64
        $region63: #{tpu_custom_call.1} parent=39 // pred_region
          %s1893 = smul.u32 16, %s31
          %s1895 = ssub.s32 4096, 4096
          %1896 = vsyncadd %s1886, %s1895
          %s1897 = smul.addr %s1893, 4
          %s1898 = smul.addr %s30, 64
          %s1899 = sadd.s32 %s1897, %s1898
          %s1900 = smul.addr %s1899, 64
          %s1901 = scalar_lea.hbm %s5, %s1900
          %s1902 = sshll.u32 %s1889, 4
          %s1903 = int_to_ptr.vmem [resolvable:$true] %s1902
          %1908 = dma.vmem_to_hbm [thread:$0]  %s1903, 4096, %s1901, %s1886, 64, 64, 4
        $region64: #{tpu_custom_call.1} parent=39 // pred_fallthru
          _
      $region40: #{tpu_custom_call.1} parent=5 // pred_fallthru
        _
      %p1909 = scmp.le.s32.totalorder 2, %s21
      // Predicated region
      $region65: #{tpu_custom_call.1} parent=5 // pred_check
        %p1910 = pneg %p1909
      $region66: #{tpu_custom_call.1} parent=5 // pred_check_branch
        %1912 = sbr.rel (%p1910) target = $region68
      $region67: #{tpu_custom_call.1} parent=5 // pred_region
        %s1913 = ssub.s32 %s21, 2
        // Predicated region
        $region69: #{tpu_custom_call.1} parent=67 // pred_check
          %p1914 = pneg %p206
        $region70: #{tpu_custom_call.1} parent=67 // pred_check_branch
          %1916 = sbr.rel (%p1914) target = $region72
        $region71: #{tpu_custom_call.1} parent=67 // pred_region
          %s1917 = sand.u32 %s191, 1
          %s1918 = scalar_lea.sflag [#allocation4], %s1917
          %s1919 = sand.u32 %s191, 1
          %s1920 = smul.addr %s1919, 256
          %s1921 = scalar_lea.vmem [#allocation11], %s1920
          %1922 = dma.done %s1918, 4096
        $region72: #{tpu_custom_call.1} parent=67 // pred_fallthru
          _
      $region68: #{tpu_custom_call.1} parent=5 // pred_fallthru
        _
    $region6: #{tpu_custom_call.1} parent=1 // loop_footer
      %s25 = sadd.s32 1, %s21
    $region7: #{tpu_custom_call.1} parent=1 // loop_footer_branch
      %20 = sbr.rel target = $region3
    $region8: #{tpu_custom_call.1} parent=1 // loop_exit
      _
    %1923 = vsyncpa [#allocation3], 1
    %s1924 = scalar_lea.sflag [#allocation3], 1
    %1925 = vsyncpa %s1924, 1
    %1926 = vsyncpa [#allocation6], 1
    %s1927 = scalar_lea.sflag [#allocation6], 1
    %1928 = vsyncpa %s1927, 1
    %1929 = vsyncpa [#allocation9], 1
    %1930 = vsyncpa [#allocation4], 1
    %s1931 = scalar_lea.sflag [#allocation4], 1
    %1932 = vsyncpa %s1931, 1

</llo_original>
